<compile_context>
chip_gen: v7x
topology: tpu7x:2x2x1
jax: 0.10.0
libtpu: 0.0.40
codegen_flags: <defaults>
</compile_context>

<pallas_src>
import functools

import jax
import jax.numpy as jnp
import numpy as np
from jax.experimental import pallas as pl
from jax.experimental.pallas import tpu as pltpu

NEG_SLOPE = 0.01  # PyTorch nn.LeakyReLU default


def _lrelu(x):
    return jnp.where(x > 0, x, NEG_SLOPE * x)


def lstm_model_kernel(src_ref, dw_ref, refv_ref,
                      wb_ref, bb_ref,
                      wih_ref, whh_ref, bl_ref,
                      wh_ref, bh_ref,
                      wo_ref, bo_ref,
                      out_ref, *, batch, seq_len):
    """Full LSTMModel forward for one batch.

    src_ref : (T*B, D_in)   time-major flattened input     VMEM
    dw_ref  : (B, D_out), refv_ref: (B, D_out)
    wb_ref  : (D_in, H1), bb_ref: (1, H1)                   -- biis
    wih_ref : (H1, 4*H2), whh_ref: (H2, 4*H2), bl_ref: (1, 4*H2)
              fused LSTM weights, gate order [i, f, o, g]
              (bias_ih + bias_hh already summed into bl)
    wh_ref  : (H2, H3), bh_ref: (1, H3)                     -- hidden_lyr
    wo_ref  : (H3, D_out), bo_ref: (1, D_out)               -- lyr_out
    out_ref : (B, D_out)
    """
    B = batch
    T = seq_len
    H2 = whh_ref.shape[0]

    # ---- loop-invariant loads (hoisted out of the recurrence) ---------------
    whh = whh_ref[...]                                       # (H2, 4*H2)

    # ---- input path, fully outside the serial recurrence --------------------
    # biis + LeakyReLU over all timesteps at once: (T*B, D_in) @ (D_in, H1)
    x_all = _lrelu(jnp.dot(src_ref[...], wb_ref[...],
                           preferred_element_type=jnp.float32) + bb_ref[...])
    # Input contribution to all gates, bias folded in once:
    # (T*B, H1) @ (H1, 4*H2) -> (T*B, 4*H2), gate order [i, f, o, g].
    gates_x = jnp.dot(x_all, wih_ref[...],
                      preferred_element_type=jnp.float32) + bl_ref[...]

    # ---- serial recurrence: one (B,H2)@(H2,4*H2) matmul per timestep --------
    h = jnp.zeros((B, H2), jnp.float32)
    c = jnp.zeros((B, H2), jnp.float32)
    for t in range(T):                       # T is small and static -> unroll
        g_all = gates_x[t * B:(t + 1) * B, :] + jnp.dot(
            h, whh, preferred_element_type=jnp.float32)      # (B, 4*H2)
        ifo = jax.nn.sigmoid(g_all[:, :3 * H2])              # one dense sigmoid
        g_g = jnp.tanh(g_all[:, 3 * H2:])                    # one dense tanh
        i_g = ifo[:, :H2]
        f_g = ifo[:, H2:2 * H2]
        o_g = ifo[:, 2 * H2:3 * H2]
        c = f_g * c + i_g * g_g
        h = o_g * jnp.tanh(c)

    # ---- output head (h == h_n squeezed to (B, H2)) --------------------------
    y = _lrelu(jnp.dot(h, wh_ref[...], preferred_element_type=jnp.float32)
               + bh_ref[...])                                 # (B, H3)
    y = jnp.dot(y, wo_ref[...], preferred_element_type=jnp.float32) + bo_ref[...]

    # training_with_dw_mask=True branch:
    #   src = ref*dw + (1 - dw)*src + relu(src*dw - ref*dw)
    dw = dw_ref[...]
    rv = refv_ref[...]
    y = rv * dw + (1.0 - dw) * y + jnp.maximum(y * dw - rv * dw, 0.0)

    out_ref[...] = y.astype(out_ref.dtype)


def fuse_lstm_params(p):
    """Fuse per-gate LSTM weights into lane-dense concatenated matrices.

    PyTorch LSTM gate order is [i, f, g, o]; we reorder to [i, f, o, g] so the
    kernel can apply sigmoid to one contiguous 3*H2 lane range and tanh to the
    trailing H2 lanes.
    """
    order = (0, 1, 3, 2)
    return {
        "wb": p["wb"], "bb": p["bb"],
        "wih_cat": jnp.concatenate([p["wih"][k] for k in order], axis=1),
        "whh_cat": jnp.concatenate([p["whh"][k] for k in order], axis=1),
        "bl_cat":  jnp.concatenate([p["bl"][k] for k in order], axis=1),
        "wh": p["wh"], "bh": p["bh"],
        "wo": p["wo"], "bo": p["bo"],
    }


def lstm_model_forward(src, dw_filter, ref, params):
    B, T, D_in = src.shape
    fp = fuse_lstm_params(params)           # cheap; precompute outside in prod
    d_out = fp["wo"].shape[1]

    # Time-major flat layout: row t*B + b holds (timestep t, batch b), so the
    # kernel reads a contiguous (B, 4*H2) slab of gates_x per step.
    src_tm = jnp.transpose(src, (1, 0, 2)).reshape(T * B, D_in)

    args = (src_tm, dw_filter, ref,
            fp["wb"], fp["bb"],
            fp["wih_cat"], fp["whh_cat"], fp["bl_cat"],
            fp["wh"], fp["bh"],
            fp["wo"], fp["bo"])
    vmem = pl.BlockSpec(memory_space=pltpu.MemorySpace.VMEM)
    kernel = functools.partial(lstm_model_kernel, batch=B, seq_len=T)
    # TODO(synk): for large production batches, add a batch grid with
    # dimension_semantics=("parallel",) to use both v7x TensorCores.
    return pl.pallas_call(
        kernel,
        out_shape=jax.ShapeDtypeStruct((B, d_out), jnp.float32),
        in_specs=[vmem] * len(args),
        out_specs=vmem,
    )(*args)


def reference_forward(src, dw_filter, ref, p):
    """Pure-JAX reference mirroring the PyTorch forward (unfused weights)."""
    B, T, _ = src.shape
    H2 = p["whh"].shape[1]
    x = _lrelu(src @ p["wb"] + p["bb"])                       # (B, T, H1)
    h = jnp.zeros((B, H2), jnp.float32)
    c = jnp.zeros((B, H2), jnp.float32)
    for t in range(T):
        xt = x[:, t, :]
        gates = [xt @ p["wih"][k] + h @ p["whh"][k] + p["bl"][k] for k in range(4)]
        i_g = jax.nn.sigmoid(gates[0])
        f_g = jax.nn.sigmoid(gates[1])
        g_g = jnp.tanh(gates[2])
        o_g = jax.nn.sigmoid(gates[3])
        c = f_g * c + i_g * g_g
        h = o_g * jnp.tanh(c)
    y = _lrelu(h @ p["wh"] + p["bh"])
    y = y @ p["wo"] + p["bo"]
    return ref * dw_filter + (1.0 - dw_filter) * y + jax.nn.relu(
        y * dw_filter - ref * dw_filter)


def init_params(key, model_structure):
    d_in, h1, h2 = model_structure[0], model_structure[1], model_structure[2]
    h3, d_out = model_structure[-2], model_structure[-1]
    keys = jax.random.split(key, 12)
    s = 0.1
    return {
        "wb":  s * jax.random.normal(keys[0], (d_in, h1), jnp.float32),
        "bb":  s * jax.random.normal(keys[1], (1, h1), jnp.float32),
        "wih": s * jax.random.normal(keys[2], (4, h1, h2), jnp.float32),
        "whh": s * jax.random.normal(keys[3], (4, h2, h2), jnp.float32),
        "bl":  s * jax.random.normal(keys[4], (4, 1, h2), jnp.float32),
        "wh":  s * jax.random.normal(keys[5], (h2, h3), jnp.float32),
        "bh":  s * jax.random.normal(keys[6], (1, h3), jnp.float32),
        "wo":  s * jax.random.normal(keys[7], (h3, d_out), jnp.float32),
        "bo":  s * jax.random.normal(keys[8], (1, d_out), jnp.float32),
    }


if __name__ == "__main__":
    model_structure = [16, 32, 32, 32, 16]   # [D_in, H1, H2, H3, D_out]
    B, T = 2, 8

    key = jax.random.PRNGKey(0)
    k_src, k_dw, k_ref, k_par = jax.random.split(key, 4)

    src = jax.random.normal(k_src, (B, T, model_structure[0]), jnp.float32)
    dw_filter = (jax.random.uniform(k_dw, (B, model_structure[-1]),
                                    jnp.float32) > 0.5).astype(jnp.float32)
    ref = jax.random.normal(k_ref, (B, model_structure[-1]), jnp.float32)

    params = init_params(k_par, model_structure)

    out = lstm_model_forward(src, dw_filter, ref, params)
    out = jax.block_until_ready(out)

    expected = reference_forward(src, dw_filter, ref, params)
    np.testing.assert_allclose(np.asarray(out), np.asarray(expected),
                               rtol=1e-5, atol=1e-5)
    print("KERNEL_OK")
</pallas_src>

<mosaic_0001>
module attributes {stable_mosaic.version = 11 : i64} {
  func.func @lstm_model_kernel(%arg0: memref<16x16xf32, #tpu.memory_space<vmem>>, %arg1: memref<2x16xf32, #tpu.memory_space<vmem>>, %arg2: memref<2x16xf32, #tpu.memory_space<vmem>>, %arg3: memref<16x32xf32, #tpu.memory_space<vmem>>, %arg4: memref<1x32xf32, #tpu.memory_space<vmem>>, %arg5: memref<32x128xf32, #tpu.memory_space<vmem>>, %arg6: memref<32x128xf32, #tpu.memory_space<vmem>>, %arg7: memref<1x128xf32, #tpu.memory_space<vmem>>, %arg8: memref<32x32xf32, #tpu.memory_space<vmem>>, %arg9: memref<1x32xf32, #tpu.memory_space<vmem>>, %arg10: memref<32x16xf32, #tpu.memory_space<vmem>>, %arg11: memref<1x16xf32, #tpu.memory_space<vmem>>, %arg12: memref<2x16xf32, #tpu.memory_space<vmem>>) attributes {dimension_semantics = [], scalar_prefetch = 0 : i64, scratch_operands = 0 : i64, tpu.core_type = #tpu.core_type<tc>} {
    %c0 = arith.constant 0 : index
    %c0_0 = arith.constant 0 : index
    %0 = vector.load %arg6[%c0, %c0_0] : memref<32x128xf32, #tpu.memory_space<vmem>>, vector<32x128xf32>
    %c0_1 = arith.constant 0 : index
    %c0_2 = arith.constant 0 : index
    %1 = vector.load %arg0[%c0_1, %c0_2] : memref<16x16xf32, #tpu.memory_space<vmem>>, vector<16x16xf32>
    %c0_3 = arith.constant 0 : index
    %c0_4 = arith.constant 0 : index
    %2 = vector.load %arg3[%c0_3, %c0_4] : memref<16x32xf32, #tpu.memory_space<vmem>>, vector<16x32xf32>
    %cst = arith.constant dense<0.000000e+00> : vector<16x32xf32>
    %3 = tpu.matmul %1, %2, %cst {dimension_numbers = #tpu.dot_dimension_numbers<[1], [0], [0], [1], [0, 0, 1, 1], [], []>} : vector<16x16xf32>, vector<16x32xf32>, vector<16x32xf32> -> vector<16x32xf32>
    %c0_5 = arith.constant 0 : index
    %c0_6 = arith.constant 0 : index
    %4 = vector.load %arg4[%c0_5, %c0_6] : memref<1x32xf32, #tpu.memory_space<vmem>>, vector<1x32xf32>
    %5 = vector.broadcast %4 : vector<1x32xf32> to vector<16x32xf32>
    %6 = arith.addf %3, %5 : vector<16x32xf32>
    %cst_7 = arith.constant 0.000000e+00 : f32
    %7 = vector.broadcast %cst_7 : f32 to vector<16x32xf32>
    %8 = arith.cmpf ogt, %6, %7 : vector<16x32xf32>
    %cst_8 = arith.constant 0.00999999977 : f32
    %9 = vector.broadcast %cst_8 : f32 to vector<16x32xf32>
    %10 = arith.mulf %9, %6 : vector<16x32xf32>
    %11 = arith.select %8, %6, %10 : vector<16x32xi1>, vector<16x32xf32>
    %c0_9 = arith.constant 0 : index
    %c0_10 = arith.constant 0 : index
    %12 = vector.load %arg5[%c0_9, %c0_10] : memref<32x128xf32, #tpu.memory_space<vmem>>, vector<32x128xf32>
    %cst_11 = arith.constant dense<0.000000e+00> : vector<16x128xf32>
    %13 = tpu.matmul %11, %12, %cst_11 {dimension_numbers = #tpu.dot_dimension_numbers<[1], [0], [0], [1], [0, 0, 1, 1], [], []>} : vector<16x32xf32>, vector<32x128xf32>, vector<16x128xf32> -> vector<16x128xf32>
    %c0_12 = arith.constant 0 : index
    %c0_13 = arith.constant 0 : index
    %14 = vector.load %arg7[%c0_12, %c0_13] : memref<1x128xf32, #tpu.memory_space<vmem>>, vector<1x128xf32>
    %15 = vector.broadcast %14 : vector<1x128xf32> to vector<16x128xf32>
    %16 = arith.addf %13, %15 : vector<16x128xf32>
    %cst_14 = arith.constant 0.000000e+00 : f32
    %17 = vector.broadcast %cst_14 : f32 to vector<2x32xf32>
    %cst_15 = arith.constant 0.000000e+00 : f32
    %18 = vector.broadcast %cst_15 : f32 to vector<2x32xf32>
    %19 = vector.extract_strided_slice %16 {offsets = [0, 0], sizes = [2, 128], strides = [1, 1]} : vector<16x128xf32> to vector<2x128xf32>
    %cst_16 = arith.constant dense<0.000000e+00> : vector<2x128xf32>
    %20 = tpu.matmul %17, %0, %cst_16 {dimension_numbers = #tpu.dot_dimension_numbers<[1], [0], [0], [1], [0, 0, 1, 1], [], []>} : vector<2x32xf32>, vector<32x128xf32>, vector<2x128xf32> -> vector<2x128xf32>
    %21 = arith.addf %19, %20 : vector<2x128xf32>
    %22 = vector.extract_strided_slice %21 {offsets = [0, 0], sizes = [2, 96], strides = [1, 1]} : vector<2x128xf32> to vector<2x96xf32>
    %23 = arith.negf %22 : vector<2x96xf32>
    %24 = math.exp %23 : vector<2x96xf32>
    %cst_17 = arith.constant 1.000000e+00 : f32
    %25 = vector.broadcast %cst_17 : f32 to vector<2x96xf32>
    %26 = arith.addf %25, %24 : vector<2x96xf32>
    %27 = arith.divf %25, %26 : vector<2x96xf32>
    %28 = vector.extract_strided_slice %21 {offsets = [0, 96], sizes = [2, 32], strides = [1, 1]} : vector<2x128xf32> to vector<2x32xf32>
    %29 = math.tanh %28 : vector<2x32xf32>
    %30 = vector.extract_strided_slice %27 {offsets = [0, 0], sizes = [2, 32], strides = [1, 1]} : vector<2x96xf32> to vector<2x32xf32>
    %31 = vector.extract_strided_slice %27 {offsets = [0, 32], sizes = [2, 32], strides = [1, 1]} : vector<2x96xf32> to vector<2x32xf32>
    %32 = vector.extract_strided_slice %27 {offsets = [0, 64], sizes = [2, 32], strides = [1, 1]} : vector<2x96xf32> to vector<2x32xf32>
    %33 = arith.mulf %31, %18 : vector<2x32xf32>
    %34 = arith.mulf %30, %29 : vector<2x32xf32>
    %35 = arith.addf %33, %34 : vector<2x32xf32>
    %36 = math.tanh %35 : vector<2x32xf32>
    %37 = arith.mulf %32, %36 : vector<2x32xf32>
    %38 = vector.extract_strided_slice %16 {offsets = [2, 0], sizes = [2, 128], strides = [1, 1]} : vector<16x128xf32> to vector<2x128xf32>
    %cst_18 = arith.constant dense<0.000000e+00> : vector<2x128xf32>
    %39 = tpu.matmul %37, %0, %cst_18 {dimension_numbers = #tpu.dot_dimension_numbers<[1], [0], [0], [1], [0, 0, 1, 1], [], []>} : vector<2x32xf32>, vector<32x128xf32>, vector<2x128xf32> -> vector<2x128xf32>
    %40 = arith.addf %38, %39 : vector<2x128xf32>
    %41 = vector.extract_strided_slice %40 {offsets = [0, 0], sizes = [2, 96], strides = [1, 1]} : vector<2x128xf32> to vector<2x96xf32>
    %42 = arith.negf %41 : vector<2x96xf32>
    %43 = math.exp %42 : vector<2x96xf32>
    %cst_19 = arith.constant 1.000000e+00 : f32
    %44 = vector.broadcast %cst_19 : f32 to vector<2x96xf32>
    %45 = arith.addf %44, %43 : vector<2x96xf32>
    %46 = arith.divf %44, %45 : vector<2x96xf32>
    %47 = vector.extract_strided_slice %40 {offsets = [0, 96], sizes = [2, 32], strides = [1, 1]} : vector<2x128xf32> to vector<2x32xf32>
    %48 = math.tanh %47 : vector<2x32xf32>
    %49 = vector.extract_strided_slice %46 {offsets = [0, 0], sizes = [2, 32], strides = [1, 1]} : vector<2x96xf32> to vector<2x32xf32>
    %50 = vector.extract_strided_slice %46 {offsets = [0, 32], sizes = [2, 32], strides = [1, 1]} : vector<2x96xf32> to vector<2x32xf32>
    %51 = vector.extract_strided_slice %46 {offsets = [0, 64], sizes = [2, 32], strides = [1, 1]} : vector<2x96xf32> to vector<2x32xf32>
    %52 = arith.mulf %50, %35 : vector<2x32xf32>
    %53 = arith.mulf %49, %48 : vector<2x32xf32>
    %54 = arith.addf %52, %53 : vector<2x32xf32>
    %55 = math.tanh %54 : vector<2x32xf32>
    %56 = arith.mulf %51, %55 : vector<2x32xf32>
    %57 = vector.extract_strided_slice %16 {offsets = [4, 0], sizes = [2, 128], strides = [1, 1]} : vector<16x128xf32> to vector<2x128xf32>
    %cst_20 = arith.constant dense<0.000000e+00> : vector<2x128xf32>
    %58 = tpu.matmul %56, %0, %cst_20 {dimension_numbers = #tpu.dot_dimension_numbers<[1], [0], [0], [1], [0, 0, 1, 1], [], []>} : vector<2x32xf32>, vector<32x128xf32>, vector<2x128xf32> -> vector<2x128xf32>
    %59 = arith.addf %57, %58 : vector<2x128xf32>
    %60 = vector.extract_strided_slice %59 {offsets = [0, 0], sizes = [2, 96], strides = [1, 1]} : vector<2x128xf32> to vector<2x96xf32>
    %61 = arith.negf %60 : vector<2x96xf32>
    %62 = math.exp %61 : vector<2x96xf32>
    %cst_21 = arith.constant 1.000000e+00 : f32
    %63 = vector.broadcast %cst_21 : f32 to vector<2x96xf32>
    %64 = arith.addf %63, %62 : vector<2x96xf32>
    %65 = arith.divf %63, %64 : vector<2x96xf32>
    %66 = vector.extract_strided_slice %59 {offsets = [0, 96], sizes = [2, 32], strides = [1, 1]} : vector<2x128xf32> to vector<2x32xf32>
    %67 = math.tanh %66 : vector<2x32xf32>
    %68 = vector.extract_strided_slice %65 {offsets = [0, 0], sizes = [2, 32], strides = [1, 1]} : vector<2x96xf32> to vector<2x32xf32>
    %69 = vector.extract_strided_slice %65 {offsets = [0, 32], sizes = [2, 32], strides = [1, 1]} : vector<2x96xf32> to vector<2x32xf32>
    %70 = vector.extract_strided_slice %65 {offsets = [0, 64], sizes = [2, 32], strides = [1, 1]} : vector<2x96xf32> to vector<2x32xf32>
    %71 = arith.mulf %69, %54 : vector<2x32xf32>
    %72 = arith.mulf %68, %67 : vector<2x32xf32>
    %73 = arith.addf %71, %72 : vector<2x32xf32>
    %74 = math.tanh %73 : vector<2x32xf32>
    %75 = arith.mulf %70, %74 : vector<2x32xf32>
    %76 = vector.extract_strided_slice %16 {offsets = [6, 0], sizes = [2, 128], strides = [1, 1]} : vector<16x128xf32> to vector<2x128xf32>
    %cst_22 = arith.constant dense<0.000000e+00> : vector<2x128xf32>
    %77 = tpu.matmul %75, %0, %cst_22 {dimension_numbers = #tpu.dot_dimension_numbers<[1], [0], [0], [1], [0, 0, 1, 1], [], []>} : vector<2x32xf32>, vector<32x128xf32>, vector<2x128xf32> -> vector<2x128xf32>
    %78 = arith.addf %76, %77 : vector<2x128xf32>
    %79 = vector.extract_strided_slice %78 {offsets = [0, 0], sizes = [2, 96], strides = [1, 1]} : vector<2x128xf32> to vector<2x96xf32>
    %80 = arith.negf %79 : vector<2x96xf32>
    %81 = math.exp %80 : vector<2x96xf32>
    %cst_23 = arith.constant 1.000000e+00 : f32
    %82 = vector.broadcast %cst_23 : f32 to vector<2x96xf32>
    %83 = arith.addf %82, %81 : vector<2x96xf32>
    %84 = arith.divf %82, %83 : vector<2x96xf32>
    %85 = vector.extract_strided_slice %78 {offsets = [0, 96], sizes = [2, 32], strides = [1, 1]} : vector<2x128xf32> to vector<2x32xf32>
    %86 = math.tanh %85 : vector<2x32xf32>
    %87 = vector.extract_strided_slice %84 {offsets = [0, 0], sizes = [2, 32], strides = [1, 1]} : vector<2x96xf32> to vector<2x32xf32>
    %88 = vector.extract_strided_slice %84 {offsets = [0, 32], sizes = [2, 32], strides = [1, 1]} : vector<2x96xf32> to vector<2x32xf32>
    %89 = vector.extract_strided_slice %84 {offsets = [0, 64], sizes = [2, 32], strides = [1, 1]} : vector<2x96xf32> to vector<2x32xf32>
    %90 = arith.mulf %88, %73 : vector<2x32xf32>
    %91 = arith.mulf %87, %86 : vector<2x32xf32>
    %92 = arith.addf %90, %91 : vector<2x32xf32>
    %93 = math.tanh %92 : vector<2x32xf32>
    %94 = arith.mulf %89, %93 : vector<2x32xf32>
    %95 = vector.extract_strided_slice %16 {offsets = [8, 0], sizes = [2, 128], strides = [1, 1]} : vector<16x128xf32> to vector<2x128xf32>
    %cst_24 = arith.constant dense<0.000000e+00> : vector<2x128xf32>
    %96 = tpu.matmul %94, %0, %cst_24 {dimension_numbers = #tpu.dot_dimension_numbers<[1], [0], [0], [1], [0, 0, 1, 1], [], []>} : vector<2x32xf32>, vector<32x128xf32>, vector<2x128xf32> -> vector<2x128xf32>
    %97 = arith.addf %95, %96 : vector<2x128xf32>
    %98 = vector.extract_strided_slice %97 {offsets = [0, 0], sizes = [2, 96], strides = [1, 1]} : vector<2x128xf32> to vector<2x96xf32>
    %99 = arith.negf %98 : vector<2x96xf32>
    %100 = math.exp %99 : vector<2x96xf32>
    %cst_25 = arith.constant 1.000000e+00 : f32
    %101 = vector.broadcast %cst_25 : f32 to vector<2x96xf32>
    %102 = arith.addf %101, %100 : vector<2x96xf32>
    %103 = arith.divf %101, %102 : vector<2x96xf32>
    %104 = vector.extract_strided_slice %97 {offsets = [0, 96], sizes = [2, 32], strides = [1, 1]} : vector<2x128xf32> to vector<2x32xf32>
    %105 = math.tanh %104 : vector<2x32xf32>
    %106 = vector.extract_strided_slice %103 {offsets = [0, 0], sizes = [2, 32], strides = [1, 1]} : vector<2x96xf32> to vector<2x32xf32>
    %107 = vector.extract_strided_slice %103 {offsets = [0, 32], sizes = [2, 32], strides = [1, 1]} : vector<2x96xf32> to vector<2x32xf32>
    %108 = vector.extract_strided_slice %103 {offsets = [0, 64], sizes = [2, 32], strides = [1, 1]} : vector<2x96xf32> to vector<2x32xf32>
    %109 = arith.mulf %107, %92 : vector<2x32xf32>
    %110 = arith.mulf %106, %105 : vector<2x32xf32>
    %111 = arith.addf %109, %110 : vector<2x32xf32>
    %112 = math.tanh %111 : vector<2x32xf32>
    %113 = arith.mulf %108, %112 : vector<2x32xf32>
    %114 = vector.extract_strided_slice %16 {offsets = [10, 0], sizes = [2, 128], strides = [1, 1]} : vector<16x128xf32> to vector<2x128xf32>
    %cst_26 = arith.constant dense<0.000000e+00> : vector<2x128xf32>
    %115 = tpu.matmul %113, %0, %cst_26 {dimension_numbers = #tpu.dot_dimension_numbers<[1], [0], [0], [1], [0, 0, 1, 1], [], []>} : vector<2x32xf32>, vector<32x128xf32>, vector<2x128xf32> -> vector<2x128xf32>
    %116 = arith.addf %114, %115 : vector<2x128xf32>
    %117 = vector.extract_strided_slice %116 {offsets = [0, 0], sizes = [2, 96], strides = [1, 1]} : vector<2x128xf32> to vector<2x96xf32>
    %118 = arith.negf %117 : vector<2x96xf32>
    %119 = math.exp %118 : vector<2x96xf32>
    %cst_27 = arith.constant 1.000000e+00 : f32
    %120 = vector.broadcast %cst_27 : f32 to vector<2x96xf32>
    %121 = arith.addf %120, %119 : vector<2x96xf32>
    %122 = arith.divf %120, %121 : vector<2x96xf32>
    %123 = vector.extract_strided_slice %116 {offsets = [0, 96], sizes = [2, 32], strides = [1, 1]} : vector<2x128xf32> to vector<2x32xf32>
    %124 = math.tanh %123 : vector<2x32xf32>
    %125 = vector.extract_strided_slice %122 {offsets = [0, 0], sizes = [2, 32], strides = [1, 1]} : vector<2x96xf32> to vector<2x32xf32>
    %126 = vector.extract_strided_slice %122 {offsets = [0, 32], sizes = [2, 32], strides = [1, 1]} : vector<2x96xf32> to vector<2x32xf32>
    %127 = vector.extract_strided_slice %122 {offsets = [0, 64], sizes = [2, 32], strides = [1, 1]} : vector<2x96xf32> to vector<2x32xf32>
    %128 = arith.mulf %126, %111 : vector<2x32xf32>
    %129 = arith.mulf %125, %124 : vector<2x32xf32>
    %130 = arith.addf %128, %129 : vector<2x32xf32>
    %131 = math.tanh %130 : vector<2x32xf32>
    %132 = arith.mulf %127, %131 : vector<2x32xf32>
    %133 = vector.extract_strided_slice %16 {offsets = [12, 0], sizes = [2, 128], strides = [1, 1]} : vector<16x128xf32> to vector<2x128xf32>
    %cst_28 = arith.constant dense<0.000000e+00> : vector<2x128xf32>
    %134 = tpu.matmul %132, %0, %cst_28 {dimension_numbers = #tpu.dot_dimension_numbers<[1], [0], [0], [1], [0, 0, 1, 1], [], []>} : vector<2x32xf32>, vector<32x128xf32>, vector<2x128xf32> -> vector<2x128xf32>
    %135 = arith.addf %133, %134 : vector<2x128xf32>
    %136 = vector.extract_strided_slice %135 {offsets = [0, 0], sizes = [2, 96], strides = [1, 1]} : vector<2x128xf32> to vector<2x96xf32>
    %137 = arith.negf %136 : vector<2x96xf32>
    %138 = math.exp %137 : vector<2x96xf32>
    %cst_29 = arith.constant 1.000000e+00 : f32
    %139 = vector.broadcast %cst_29 : f32 to vector<2x96xf32>
    %140 = arith.addf %139, %138 : vector<2x96xf32>
    %141 = arith.divf %139, %140 : vector<2x96xf32>
    %142 = vector.extract_strided_slice %135 {offsets = [0, 96], sizes = [2, 32], strides = [1, 1]} : vector<2x128xf32> to vector<2x32xf32>
    %143 = math.tanh %142 : vector<2x32xf32>
    %144 = vector.extract_strided_slice %141 {offsets = [0, 0], sizes = [2, 32], strides = [1, 1]} : vector<2x96xf32> to vector<2x32xf32>
    %145 = vector.extract_strided_slice %141 {offsets = [0, 32], sizes = [2, 32], strides = [1, 1]} : vector<2x96xf32> to vector<2x32xf32>
    %146 = vector.extract_strided_slice %141 {offsets = [0, 64], sizes = [2, 32], strides = [1, 1]} : vector<2x96xf32> to vector<2x32xf32>
    %147 = arith.mulf %145, %130 : vector<2x32xf32>
    %148 = arith.mulf %144, %143 : vector<2x32xf32>
    %149 = arith.addf %147, %148 : vector<2x32xf32>
    %150 = math.tanh %149 : vector<2x32xf32>
    %151 = arith.mulf %146, %150 : vector<2x32xf32>
    %152 = vector.extract_strided_slice %16 {offsets = [14, 0], sizes = [2, 128], strides = [1, 1]} : vector<16x128xf32> to vector<2x128xf32>
    %cst_30 = arith.constant dense<0.000000e+00> : vector<2x128xf32>
    %153 = tpu.matmul %151, %0, %cst_30 {dimension_numbers = #tpu.dot_dimension_numbers<[1], [0], [0], [1], [0, 0, 1, 1], [], []>} : vector<2x32xf32>, vector<32x128xf32>, vector<2x128xf32> -> vector<2x128xf32>
    %154 = arith.addf %152, %153 : vector<2x128xf32>
    %155 = vector.extract_strided_slice %154 {offsets = [0, 0], sizes = [2, 96], strides = [1, 1]} : vector<2x128xf32> to vector<2x96xf32>
    %156 = arith.negf %155 : vector<2x96xf32>
    %157 = math.exp %156 : vector<2x96xf32>
    %cst_31 = arith.constant 1.000000e+00 : f32
    %158 = vector.broadcast %cst_31 : f32 to vector<2x96xf32>
    %159 = arith.addf %158, %157 : vector<2x96xf32>
    %160 = arith.divf %158, %159 : vector<2x96xf32>
    %161 = vector.extract_strided_slice %154 {offsets = [0, 96], sizes = [2, 32], strides = [1, 1]} : vector<2x128xf32> to vector<2x32xf32>
    %162 = math.tanh %161 : vector<2x32xf32>
    %163 = vector.extract_strided_slice %160 {offsets = [0, 0], sizes = [2, 32], strides = [1, 1]} : vector<2x96xf32> to vector<2x32xf32>
    %164 = vector.extract_strided_slice %160 {offsets = [0, 32], sizes = [2, 32], strides = [1, 1]} : vector<2x96xf32> to vector<2x32xf32>
    %165 = vector.extract_strided_slice %160 {offsets = [0, 64], sizes = [2, 32], strides = [1, 1]} : vector<2x96xf32> to vector<2x32xf32>
    %166 = arith.mulf %164, %149 : vector<2x32xf32>
    %167 = arith.mulf %163, %162 : vector<2x32xf32>
    %168 = arith.addf %166, %167 : vector<2x32xf32>
    %169 = math.tanh %168 : vector<2x32xf32>
    %170 = arith.mulf %165, %169 : vector<2x32xf32>
    %c0_32 = arith.constant 0 : index
    %c0_33 = arith.constant 0 : index
    %171 = vector.load %arg8[%c0_32, %c0_33] : memref<32x32xf32, #tpu.memory_space<vmem>>, vector<32x32xf32>
    %cst_34 = arith.constant dense<0.000000e+00> : vector<2x32xf32>
    %172 = tpu.matmul %170, %171, %cst_34 {dimension_numbers = #tpu.dot_dimension_numbers<[1], [0], [0], [1], [0, 0, 1, 1], [], []>} : vector<2x32xf32>, vector<32x32xf32>, vector<2x32xf32> -> vector<2x32xf32>
    %c0_35 = arith.constant 0 : index
    %c0_36 = arith.constant 0 : index
    %173 = vector.load %arg9[%c0_35, %c0_36] : memref<1x32xf32, #tpu.memory_space<vmem>>, vector<1x32xf32>
    %174 = vector.broadcast %173 : vector<1x32xf32> to vector<2x32xf32>
    %175 = arith.addf %172, %174 : vector<2x32xf32>
    %cst_37 = arith.constant 0.000000e+00 : f32
    %176 = vector.broadcast %cst_37 : f32 to vector<2x32xf32>
    %177 = arith.cmpf ogt, %175, %176 : vector<2x32xf32>
    %cst_38 = arith.constant 0.00999999977 : f32
    %178 = vector.broadcast %cst_38 : f32 to vector<2x32xf32>
    %179 = arith.mulf %178, %175 : vector<2x32xf32>
    %180 = arith.select %177, %175, %179 : vector<2x32xi1>, vector<2x32xf32>
    %c0_39 = arith.constant 0 : index
    %c0_40 = arith.constant 0 : index
    %181 = vector.load %arg10[%c0_39, %c0_40] : memref<32x16xf32, #tpu.memory_space<vmem>>, vector<32x16xf32>
    %cst_41 = arith.constant dense<0.000000e+00> : vector<2x16xf32>
    %182 = tpu.matmul %180, %181, %cst_41 {dimension_numbers = #tpu.dot_dimension_numbers<[1], [0], [0], [1], [0, 0, 1, 1], [], []>} : vector<2x32xf32>, vector<32x16xf32>, vector<2x16xf32> -> vector<2x16xf32>
    %c0_42 = arith.constant 0 : index
    %c0_43 = arith.constant 0 : index
    %183 = vector.load %arg11[%c0_42, %c0_43] : memref<1x16xf32, #tpu.memory_space<vmem>>, vector<1x16xf32>
    %184 = vector.broadcast %183 : vector<1x16xf32> to vector<2x16xf32>
    %185 = arith.addf %182, %184 : vector<2x16xf32>
    %c0_44 = arith.constant 0 : index
    %c0_45 = arith.constant 0 : index
    %186 = vector.load %arg1[%c0_44, %c0_45] : memref<2x16xf32, #tpu.memory_space<vmem>>, vector<2x16xf32>
    %c0_46 = arith.constant 0 : index
    %c0_47 = arith.constant 0 : index
    %187 = vector.load %arg2[%c0_46, %c0_47] : memref<2x16xf32, #tpu.memory_space<vmem>>, vector<2x16xf32>
    %188 = arith.mulf %187, %186 : vector<2x16xf32>
    %cst_48 = arith.constant 1.000000e+00 : f32
    %189 = vector.broadcast %cst_48 : f32 to vector<2x16xf32>
    %190 = arith.subf %189, %186 : vector<2x16xf32>
    %191 = arith.mulf %190, %185 : vector<2x16xf32>
    %192 = arith.addf %188, %191 : vector<2x16xf32>
    %193 = arith.mulf %185, %186 : vector<2x16xf32>
    %194 = arith.mulf %187, %186 : vector<2x16xf32>
    %195 = arith.subf %193, %194 : vector<2x16xf32>
    %cst_49 = arith.constant 0.000000e+00 : f32
    %196 = vector.broadcast %cst_49 : f32 to vector<2x16xf32>
    %197 = arith.maximumf %195, %196 : vector<2x16xf32>
    %198 = arith.addf %192, %197 : vector<2x16xf32>
    %c0_50 = arith.constant 0 : index
    %c0_51 = arith.constant 0 : index
    %199 = vector.load %arg12[%c0_50, %c0_51] : memref<2x16xf32, #tpu.memory_space<vmem>>, vector<2x16xf32>
    tpu.vector_store %arg12[%c0_50, %c0_51], %198 {strides = array<i32>} : memref<2x16xf32, #tpu.memory_space<vmem>>, vector<2x16xf32>,
    return
  }
}

</mosaic_0001>

<llo_original>
// kernel: tpu_custom_call.1
$region0: #{tpu_custom_call.1}
  #allocation0 [shape = 'u32[]', space=smem, size = 0x4, offset = 0x4, fixed_abs, tag = 'smem constant byte address 0x4 - core index']
  #allocation1 [shape = 'u32[144,128]{1,0:T(1,128)}', space=vmem, size = 0x12000, scoped, tag = 'internal scratch']
  %s0 = inlined_call_operand.hbm [shape: f32[16,16], index: 0, kind: input, shape index: {}]
  %s1 = inlined_call_operand.vmem [shape: f32[2,16], index: 1, kind: input, shape index: {}]
  %s2 = inlined_call_operand.hbm [shape: f32[2,16], index: 2, kind: input, shape index: {}]
  %s3 = inlined_call_operand.hbm [shape: f32[16,32], index: 3, kind: input, shape index: {}]
  %s4 = inlined_call_operand.hbm [shape: f32[1,32], index: 4, kind: input, shape index: {}]
  %s5 = inlined_call_operand.vmem [shape: f32[32,128], index: 5, kind: input, shape index: {}]
  %s6 = inlined_call_operand.vmem [shape: f32[32,128], index: 6, kind: input, shape index: {}]
  %s7 = inlined_call_operand.hbm [shape: f32[1,128], index: 7, kind: input, shape index: {}]
  %s8 = inlined_call_operand.hbm [shape: f32[32,32], index: 8, kind: input, shape index: {}]
  %s9 = inlined_call_operand.hbm [shape: f32[1,32], index: 9, kind: input, shape index: {}]
  %s10 = inlined_call_operand.vmem [shape: f32[32,16], index: 10, kind: input, shape index: {}]
  %s11 = inlined_call_operand.vmem [shape: f32[1,16], index: 11, kind: input, shape index: {}]
  %s12 = inlined_call_operand.hbm [shape: f32[2,16], index: 12, kind: output, shape index: {}]
  %s13 = sld [smem:[#allocation0]]
  $region86: #{tpu_custom_call.1} parent=0
    _
  %s15 = ssub.s32 1, %s13
  %s16 = scalar_select 0, %s15, %s13
  $region1: #{tpu_custom_call.1} parent=0
    #allocation2 [shape = 'u8[8192]{0}', space=vmem, size = 0x2000, scoped, tag = 'input window, operand 0, single buffered']
    #allocation3 [shape = 's32[1]{0}', space=sflag, size = 0x4, scoped, tag = 'scoped memory for tpu_custom_call.1']
    #allocation4 [shape = 's32[1]{0}', space=sflag, size = 0x4, scoped, tag = 'scoped memory for tpu_custom_call.1']
    #allocation5 [shape = 'u8[1024]{0}', space=vmem, size = 0x400, scoped, tag = 'input window, operand 2, single buffered']
    #allocation6 [shape = 's32[1]{0}', space=sflag, size = 0x4, scoped, tag = 'scoped memory for tpu_custom_call.1']
    #allocation7 [shape = 'u8[8192]{0}', space=vmem, size = 0x2000, scoped, tag = 'input window, operand 3, single buffered']
    #allocation8 [shape = 'u8[512]{0}', space=vmem, size = 0x400, scoped, tag = 'input window, operand 4, single buffered']
    #allocation9 [shape = 's32[1]{0}', space=sflag, size = 0x4, scoped, tag = 'scoped memory for tpu_custom_call.1']
    #allocation10 [shape = 'u8[512]{0}', space=vmem, size = 0x400, scoped, tag = 'input window, operand 7, single buffered']
    #allocation11 [shape = 'u8[16384]{0}', space=vmem, size = 0x4000, scoped, tag = 'input window, operand 8, single buffered']
    #allocation12 [shape = 's32[1]{0}', space=sflag, size = 0x4, scoped, tag = 'scoped memory for tpu_custom_call.1']
    #allocation13 [shape = 'u8[512]{0}', space=vmem, size = 0x400, scoped, tag = 'input window, operand 9, single buffered']
    #allocation14 [shape = 'u8[1024]{0}', space=vmem, size = 0x400, scoped, tag = 'output window, operand 0, single buffered']
    %17 = vsyncpa [#allocation3], 0
    %18 = vsyncpa [#allocation6], 0
    %19 = vsyncpa [#allocation9], 0
    %20 = vsyncpa [#allocation12], 0
    %21 = vsyncpa [#allocation4], 0
    // Predicated region
    $region2: #{tpu_custom_call.1} parent=1 // pred_check
      _
    $region3: #{tpu_custom_call.1} parent=1 // pred_check_branch
      %23 = sbr.rel (0) target = $region5
    $region4: #{tpu_custom_call.1} parent=1 // pred_region
      %s25 = ssub.s32 256, 256
      %26 = vsyncadd [#allocation3], %s25
      %s27 = sshll.u32 [#allocation2], 4
      %s28 = int_to_ptr.vmem [resolvable:$true] %s27
      %33 = dma.hbm_to_vmem [thread:$0]  %s0, 256, %s28, [#allocation3], 128, 128, 8
    $region5: #{tpu_custom_call.1} parent=1 // pred_fallthru
      _
    // Predicated region
    $region6: #{tpu_custom_call.1} parent=1 // pred_check
      _
    $region7: #{tpu_custom_call.1} parent=1 // pred_check_branch
      %35 = sbr.rel (0) target = $region9
    $region8: #{tpu_custom_call.1} parent=1 // pred_region
      _
    $region9: #{tpu_custom_call.1} parent=1 // pred_fallthru
      _
    // Predicated region
    $region10: #{tpu_custom_call.1} parent=1 // pred_check
      _
    $region11: #{tpu_custom_call.1} parent=1 // pred_check_branch
      %37 = sbr.rel (0) target = $region13
    $region12: #{tpu_custom_call.1} parent=1 // pred_region
      %s39 = ssub.s32 32, 32
      %40 = vsyncadd [#allocation6], %s39
      %s42 = sshll.u32 [#allocation5], 4
      %s43 = int_to_ptr.vmem [resolvable:$true] %s42
      %45 = dma.hbm_to_vmem [thread:$0]  %s2, 32, %s43, [#allocation6]
    $region13: #{tpu_custom_call.1} parent=1 // pred_fallthru
      _
    // Predicated region
    $region14: #{tpu_custom_call.1} parent=1 // pred_check
      _
    $region15: #{tpu_custom_call.1} parent=1 // pred_check_branch
      %47 = sbr.rel (0) target = $region17
    $region16: #{tpu_custom_call.1} parent=1 // pred_region
      %s49 = ssub.s32 256, 256
      %50 = vsyncadd [#allocation6], %s49
      %s51 = sshll.u32 [#allocation7], 4
      %s52 = int_to_ptr.vmem [resolvable:$true] %s51
      %57 = dma.hbm_to_vmem [thread:$0]  %s3, 256, %s52, [#allocation6], 128, 128, 8
    $region17: #{tpu_custom_call.1} parent=1 // pred_fallthru
      _
    // Predicated region
    $region18: #{tpu_custom_call.1} parent=1 // pred_check
      _
    $region19: #{tpu_custom_call.1} parent=1 // pred_check_branch
      %59 = sbr.rel (0) target = $region21
    $region20: #{tpu_custom_call.1} parent=1 // pred_region
      %s61 = ssub.s32 16, 16
      %62 = vsyncadd [#allocation9], %s61
      %s64 = sshll.u32 [#allocation8], 4
      %s65 = int_to_ptr.vmem [resolvable:$true] %s64
      %67 = dma.hbm_to_vmem [thread:$0]  %s4, 16, %s65, [#allocation9]
    $region21: #{tpu_custom_call.1} parent=1 // pred_fallthru
      _
    // Predicated region
    $region22: #{tpu_custom_call.1} parent=1 // pred_check
      _
    $region23: #{tpu_custom_call.1} parent=1 // pred_check_branch
      %69 = sbr.rel (0) target = $region25
    $region24: #{tpu_custom_call.1} parent=1 // pred_region
      _
    $region25: #{tpu_custom_call.1} parent=1 // pred_fallthru
      _
    // Predicated region
    $region26: #{tpu_custom_call.1} parent=1 // pred_check
      _
    $region27: #{tpu_custom_call.1} parent=1 // pred_check_branch
      %71 = sbr.rel (0) target = $region29
    $region28: #{tpu_custom_call.1} parent=1 // pred_region
      _
    $region29: #{tpu_custom_call.1} parent=1 // pred_fallthru
      _
    // Predicated region
    $region30: #{tpu_custom_call.1} parent=1 // pred_check
      _
    $region31: #{tpu_custom_call.1} parent=1 // pred_check_branch
      %73 = sbr.rel (0) target = $region33
    $region32: #{tpu_custom_call.1} parent=1 // pred_region
      %s75 = ssub.s32 16, 16
      %76 = vsyncadd [#allocation9], %s75
      %s78 = sshll.u32 [#allocation10], 4
      %s79 = int_to_ptr.vmem [resolvable:$true] %s78
      %81 = dma.hbm_to_vmem [thread:$0]  %s7, 16, %s79, [#allocation9]
    $region33: #{tpu_custom_call.1} parent=1 // pred_fallthru
      _
    // Predicated region
    $region34: #{tpu_custom_call.1} parent=1 // pred_check
      _
    $region35: #{tpu_custom_call.1} parent=1 // pred_check_branch
      %83 = sbr.rel (0) target = $region37
    $region36: #{tpu_custom_call.1} parent=1 // pred_region
      %s85 = ssub.s32 512, 512
      %86 = vsyncadd [#allocation12], %s85
      %s87 = sshll.u32 [#allocation11], 4
      %s88 = int_to_ptr.vmem [resolvable:$true] %s87
      %93 = dma.hbm_to_vmem [thread:$0]  %s8, 512, %s88, [#allocation12], 128, 128, 8
    $region37: #{tpu_custom_call.1} parent=1 // pred_fallthru
      _
    // Predicated region
    $region38: #{tpu_custom_call.1} parent=1 // pred_check
      _
    $region39: #{tpu_custom_call.1} parent=1 // pred_check_branch
      %95 = sbr.rel (0) target = $region41
    $region40: #{tpu_custom_call.1} parent=1 // pred_region
      %s97 = ssub.s32 16, 16
      %98 = vsyncadd [#allocation12], %s97
      %s100 = sshll.u32 [#allocation13], 4
      %s101 = int_to_ptr.vmem [resolvable:$true] %s100
      %103 = dma.hbm_to_vmem [thread:$0]  %s9, 16, %s101, [#allocation12]
    $region41: #{tpu_custom_call.1} parent=1 // pred_fallthru
      _
    // Predicated region
    $region42: #{tpu_custom_call.1} parent=1 // pred_check
      _
    $region43: #{tpu_custom_call.1} parent=1 // pred_check_branch
      %105 = sbr.rel (0) target = $region45
    $region44: #{tpu_custom_call.1} parent=1 // pred_region
      _
    $region45: #{tpu_custom_call.1} parent=1 // pred_fallthru
      _
    // Predicated region
    $region46: #{tpu_custom_call.1} parent=1 // pred_check
      _
    $region47: #{tpu_custom_call.1} parent=1 // pred_check_branch
      %107 = sbr.rel (0) target = $region49
    $region48: #{tpu_custom_call.1} parent=1 // pred_region
      _
    $region49: #{tpu_custom_call.1} parent=1 // pred_fallthru
      _
    // Predicated region
    $region50: #{tpu_custom_call.1} parent=1 // pred_check
      _
    $region51: #{tpu_custom_call.1} parent=1 // pred_check_branch
      %109 = sbr.rel (0) target = $region53
    $region52: #{tpu_custom_call.1} parent=1 // pred_region
      %110 = dma.done [#allocation3], 256
    $region53: #{tpu_custom_call.1} parent=1 // pred_fallthru
      _
    // Predicated region
    $region54: #{tpu_custom_call.1} parent=1 // pred_check
      _
    $region55: #{tpu_custom_call.1} parent=1 // pred_check_branch
      %112 = sbr.rel (0) target = $region57
    $region56: #{tpu_custom_call.1} parent=1 // pred_region
      %113 = dma.done [#allocation6], 32
    $region57: #{tpu_custom_call.1} parent=1 // pred_fallthru
      _
    // Predicated region
    $region58: #{tpu_custom_call.1} parent=1 // pred_check
      _
    $region59: #{tpu_custom_call.1} parent=1 // pred_check_branch
      %115 = sbr.rel (0) target = $region61
    $region60: #{tpu_custom_call.1} parent=1 // pred_region
      %116 = dma.done [#allocation6], 256
    $region61: #{tpu_custom_call.1} parent=1 // pred_fallthru
      _
    // Predicated region
    $region62: #{tpu_custom_call.1} parent=1 // pred_check
      _
    $region63: #{tpu_custom_call.1} parent=1 // pred_check_branch
      %118 = sbr.rel (0) target = $region65
    $region64: #{tpu_custom_call.1} parent=1 // pred_region
      %119 = dma.done [#allocation9], 16
    $region65: #{tpu_custom_call.1} parent=1 // pred_fallthru
      _
    // Predicated region
    $region66: #{tpu_custom_call.1} parent=1 // pred_check
      _
    $region67: #{tpu_custom_call.1} parent=1 // pred_check_branch
      %121 = sbr.rel (0) target = $region69
    $region68: #{tpu_custom_call.1} parent=1 // pred_region
      %122 = dma.done [#allocation9], 16
    $region69: #{tpu_custom_call.1} parent=1 // pred_fallthru
      _
    // Predicated region
    $region70: #{tpu_custom_call.1} parent=1 // pred_check
      _
    $region71: #{tpu_custom_call.1} parent=1 // pred_check_branch
      %124 = sbr.rel (0) target = $region73
    $region72: #{tpu_custom_call.1} parent=1 // pred_region
      %125 = dma.done [#allocation12], 512
    $region73: #{tpu_custom_call.1} parent=1 // pred_fallthru
      _
    // Predicated region
    $region74: #{tpu_custom_call.1} parent=1 // pred_check
      _
    $region75: #{tpu_custom_call.1} parent=1 // pred_check_branch
      %127 = sbr.rel (0) target = $region77
    $region76: #{tpu_custom_call.1} parent=1 // pred_region
      %128 = dma.done [#allocation12], 16
    $region77: #{tpu_custom_call.1} parent=1 // pred_fallthru
      _
    %v129 = vld [vmem:[%s6] sm:$0xff]
    %v130 = vld [vmem:[%s6 + $0x8] sm:$0xff]
    %v131 = vld [vmem:[%s6 + $0x10] sm:$0xff]
    %v132 = vld [vmem:[%s6 + $0x18] sm:$0xff]
    %v133 = vld [vmem:[#allocation2] sm:$0xff]
    %v134 = vld [vmem:[#allocation2 + $0x8] sm:$0xff]
    %v135 = vld [vmem:[#allocation7] sm:$0xff]
    %v136 = vld [vmem:[#allocation7 + $0x8] sm:$0xff]
    %v137 = vld [vmem:[#allocation8] sm:$0x1]
    %v139 = vlaneseq
    %v140 = vshrl.u32 %v139, 7
    %v141 = vsub.s32 0, %v140
    %v142 = vrot.slane %v137, %v141
    %vm144 = vcmask 130048
    %v146 = vsel %vm144, %v133, 0
    %v149 = vsel %vm144, %v134, 0
    %151 = vmatprep.subr.mxu0 0.0
    %152 = vmatpush1.msra.mxu0 %v135
    %153 = vmatprep.subr.mxu0 0.0
    %154 = vmatpush1.msra.mxu0 %v136
    %155 = vmatprep.subr.mxu0 0.0
    %156 = vmatpush1.msra.mxu0 0.0
    %157 = vmatprep.subr.mxu0 0.0
    %158 = vmatpush1.msra.mxu0 0.0
    %159 = vmatprep.subr.mxu0 0.0
    %160 = vmatpush1.msra.mxu0 0.0
    %161 = vmatprep.subr.mxu0 0.0
    %162 = vmatpush1.msra.mxu0 0.0
    %163 = vmatprep.subr.mxu0 0.0
    %164 = vmatpush1.msra.mxu0 0.0
    %165 = vmatprep.subr.mxu0 0.0
    %166 = vmatpush1.msra.mxu0 0.0
    %167 = vmatprep.subr.mxu0 0.0
    %168 = vmatpush1.msra.mxu0 0.0
    %169 = vmatprep.subr.mxu0 0.0
    %170 = vmatpush1.msra.mxu0 0.0
    %171 = vmatprep.subr.mxu0 0.0
    %172 = vmatpush1.msra.mxu0 0.0
    %173 = vmatprep.subr.mxu0 0.0
    %174 = vmatpush1.msra.mxu0 0.0
    %175 = vmatprep.subr.mxu0 0.0
    %176 = vmatpush1.msra.mxu0 0.0
    %177 = vmatprep.subr.mxu0 0.0
    %178 = vmatpush1.msra.mxu0 0.0
    %179 = vmatprep.subr.mxu0 0.0
    %180 = vmatpush1.msra.mxu0 0.0
    %181 = vmatprep.subr.mxu0 0.0
    %182 = vmatpush1.msra.mxu0 0.0
    %183 = vmatprep.subr.mxu0 0.0
    %184 = vmatpush1.msra.mxu0 0.0
    %185 = vmatprep.subr.mxu0 0.0
    %186 = vmatpush1.msra.mxu0 0.0
    %187 = vmatprep.subr.mxu0 0.0
    %188 = vmatpush1.msra.mxu0 0.0
    %189 = vmatprep.subr.mxu0 0.0
    %190 = vmatpush1.msra.mxu0 0.0
    %191 = vmatprep.subr.mxu0 0.0
    %192 = vmatpush1.msra.mxu0 0.0
    %193 = vmatprep.subr.mxu0 0.0
    %194 = vmatpush1.msra.mxu0 0.0
    %195 = vmatprep.subr.mxu0 0.0
    %196 = vmatpush1.msra.mxu0 0.0
    %197 = vmatprep.subr.mxu0 0.0
    %198 = vmatpush1.msra.mxu0 0.0
    %199 = vmatprep.subr.mxu0 0.0
    %200 = vmatpush1.msra.mxu0 0.0
    %201 = vmatprep.subr.mxu0 0.0
    %202 = vmatpush1.msra.mxu0 0.0
    %203 = vmatprep.subr.mxu0 0.0
    %204 = vmatpush1.msra.mxu0 0.0
    %205 = vmatprep.subr.mxu0 0.0
    %206 = vmatpush1.msra.mxu0 0.0
    %207 = vmatprep.subr.mxu0 0.0
    %208 = vmatpush1.msra.mxu0 0.0
    %209 = vmatprep.subr.mxu0 0.0
    %210 = vmatpush1.msra.mxu0 0.0
    %211 = vmatprep.subr.mxu0 0.0
    %212 = vmatpush1.msra.mxu0 0.0
    %213 = vmatprep.subr.mxu0 0.0
    %214 = vmatpush1.msra.mxu0 0.0
    %215 = vmatprep.mubr.f32.mxu0 0.0
    %216 = vmatmul.mubr.f32.gmra.mrb[0].mxu0 %v146
    %v217 = vpop.f32.mrb[0].mxu0
    %v218 = vadd.f32 %v142, %v217
    %v219 = vpop.f32.mrb[0].mxu0
    %220 = vmatprep.mubr.f32.mxu0 0.0
    %221 = vmatmul.mubr.f32.gmra.mrb[0].mxu0 %v149
    %v222 = vpop.f32.mrb[0].mxu0
    %v223 = vadd.f32 %v142, %v222
    %v224 = vpop.f32.mrb[0].mxu0
    %225 = vdwg.mxu0
    %vm226 = vcmp.gt.f32.partialorder %v218, 0.0
    %vm227 = vcmp.gt.f32.partialorder %v223, 0.0
    %v228 = vmul.f32 %v218, 0.01
    %v229 = vmul.f32 %v223, 0.01
    %v230 = vsel %vm226, %v218, %v228
    %v231 = vsel %vm227, %v223, %v229
    %v232 = vld [vmem:[%s5] sm:$0xff]
    %v233 = vld [vmem:[%s5 + $0x8] sm:$0xff]
    %v234 = vld [vmem:[%s5 + $0x10] sm:$0xff]
    %v235 = vld [vmem:[%s5 + $0x18] sm:$0xff]
    %v236 = vld [vmem:[#allocation10] sm:$0x1]
    %v238 = vlaneseq
    %v239 = vshrl.u32 %v238, 7
    %v240 = vsub.s32 0, %v239
    %v241 = vrot.slane %v236, %v240
    %vm243 = vcmask 261120
    %v245 = vsel %vm243, %v230, 0
    %v248 = vsel %vm243, %v231, 0
    %250 = vmatprep.subr.mxu0 0.0
    %251 = vmatpush1.msra.mxu0 %v232
    %252 = vmatprep.subr.mxu0 0.0
    %253 = vmatpush1.msra.mxu0 %v233
    %254 = vmatprep.subr.mxu0 0.0
    %255 = vmatpush1.msra.mxu0 %v234
    %256 = vmatprep.subr.mxu0 0.0
    %257 = vmatpush1.msra.mxu0 %v235
    %258 = vmatprep.subr.mxu0 0.0
    %259 = vmatpush1.msra.mxu0 0.0
    %260 = vmatprep.subr.mxu0 0.0
    %261 = vmatpush1.msra.mxu0 0.0
    %262 = vmatprep.subr.mxu0 0.0
    %263 = vmatpush1.msra.mxu0 0.0
    %264 = vmatprep.subr.mxu0 0.0
    %265 = vmatpush1.msra.mxu0 0.0
    %266 = vmatprep.subr.mxu0 0.0
    %267 = vmatpush1.msra.mxu0 0.0
    %268 = vmatprep.subr.mxu0 0.0
    %269 = vmatpush1.msra.mxu0 0.0
    %270 = vmatprep.subr.mxu0 0.0
    %271 = vmatpush1.msra.mxu0 0.0
    %272 = vmatprep.subr.mxu0 0.0
    %273 = vmatpush1.msra.mxu0 0.0
    %274 = vmatprep.subr.mxu0 0.0
    %275 = vmatpush1.msra.mxu0 0.0
    %276 = vmatprep.subr.mxu0 0.0
    %277 = vmatpush1.msra.mxu0 0.0
    %278 = vmatprep.subr.mxu0 0.0
    %279 = vmatpush1.msra.mxu0 0.0
    %280 = vmatprep.subr.mxu0 0.0
    %281 = vmatpush1.msra.mxu0 0.0
    %282 = vmatprep.subr.mxu0 0.0
    %283 = vmatpush1.msra.mxu0 0.0
    %284 = vmatprep.subr.mxu0 0.0
    %285 = vmatpush1.msra.mxu0 0.0
    %286 = vmatprep.subr.mxu0 0.0
    %287 = vmatpush1.msra.mxu0 0.0
    %288 = vmatprep.subr.mxu0 0.0
    %289 = vmatpush1.msra.mxu0 0.0
    %290 = vmatprep.subr.mxu0 0.0
    %291 = vmatpush1.msra.mxu0 0.0
    %292 = vmatprep.subr.mxu0 0.0
    %293 = vmatpush1.msra.mxu0 0.0
    %294 = vmatprep.subr.mxu0 0.0
    %295 = vmatpush1.msra.mxu0 0.0
    %296 = vmatprep.subr.mxu0 0.0
    %297 = vmatpush1.msra.mxu0 0.0
    %298 = vmatprep.subr.mxu0 0.0
    %299 = vmatpush1.msra.mxu0 0.0
    %300 = vmatprep.subr.mxu0 0.0
    %301 = vmatpush1.msra.mxu0 0.0
    %302 = vmatprep.subr.mxu0 0.0
    %303 = vmatpush1.msra.mxu0 0.0
    %304 = vmatprep.subr.mxu0 0.0
    %305 = vmatpush1.msra.mxu0 0.0
    %306 = vmatprep.subr.mxu0 0.0
    %307 = vmatpush1.msra.mxu0 0.0
    %308 = vmatprep.subr.mxu0 0.0
    %309 = vmatpush1.msra.mxu0 0.0
    %310 = vmatprep.subr.mxu0 0.0
    %311 = vmatpush1.msra.mxu0 0.0
    %312 = vmatprep.subr.mxu0 0.0
    %313 = vmatpush1.msra.mxu0 0.0
    %314 = vmatprep.mubr.f32.mxu0 0.0
    %315 = vmatmul.mubr.f32.gmra.mrb[0].mxu0 %v245
    %v316 = vpop.f32.mrb[0].mxu0
    %v317 = vadd.f32 %v241, %v316
    %v318 = vpop.f32.mrb[0].mxu0
    %319 = vmatprep.mubr.f32.mxu0 0.0
    %320 = vmatmul.mubr.f32.gmra.mrb[0].mxu0 %v248
    %v321 = vpop.f32.mrb[0].mxu0
    %v322 = vadd.f32 %v241, %v321
    %v323 = vpop.f32.mrb[0].mxu0
    %324 = vdwg.mxu0
    %v326 = vsel %vm243, 0.0, 0
    %328 = vmatprep.subr.mxu0 0.0
    %329 = vmatpush1.msra.mxu0 %v129
    %330 = vmatprep.subr.mxu0 0.0
    %331 = vmatpush1.msra.mxu0 %v130
    %332 = vmatprep.subr.mxu0 0.0
    %333 = vmatpush1.msra.mxu0 %v131
    %334 = vmatprep.subr.mxu0 0.0
    %335 = vmatpush1.msra.mxu0 %v132
    %336 = vmatprep.subr.mxu0 0.0
    %337 = vmatpush1.msra.mxu0 0.0
    %338 = vmatprep.subr.mxu0 0.0
    %339 = vmatpush1.msra.mxu0 0.0
    %340 = vmatprep.subr.mxu0 0.0
    %341 = vmatpush1.msra.mxu0 0.0
    %342 = vmatprep.subr.mxu0 0.0
    %343 = vmatpush1.msra.mxu0 0.0
    %344 = vmatprep.subr.mxu0 0.0
    %345 = vmatpush1.msra.mxu0 0.0
    %346 = vmatprep.subr.mxu0 0.0
    %347 = vmatpush1.msra.mxu0 0.0
    %348 = vmatprep.subr.mxu0 0.0
    %349 = vmatpush1.msra.mxu0 0.0
    %350 = vmatprep.subr.mxu0 0.0
    %351 = vmatpush1.msra.mxu0 0.0
    %352 = vmatprep.subr.mxu0 0.0
    %353 = vmatpush1.msra.mxu0 0.0
    %354 = vmatprep.subr.mxu0 0.0
    %355 = vmatpush1.msra.mxu0 0.0
    %356 = vmatprep.subr.mxu0 0.0
    %357 = vmatpush1.msra.mxu0 0.0
    %358 = vmatprep.subr.mxu0 0.0
    %359 = vmatpush1.msra.mxu0 0.0
    %360 = vmatprep.subr.mxu0 0.0
    %361 = vmatpush1.msra.mxu0 0.0
    %362 = vmatprep.subr.mxu0 0.0
    %363 = vmatpush1.msra.mxu0 0.0
    %364 = vmatprep.subr.mxu0 0.0
    %365 = vmatpush1.msra.mxu0 0.0
    %366 = vmatprep.subr.mxu0 0.0
    %367 = vmatpush1.msra.mxu0 0.0
    %368 = vmatprep.subr.mxu0 0.0
    %369 = vmatpush1.msra.mxu0 0.0
    %370 = vmatprep.subr.mxu0 0.0
    %371 = vmatpush1.msra.mxu0 0.0
    %372 = vmatprep.subr.mxu0 0.0
    %373 = vmatpush1.msra.mxu0 0.0
    %374 = vmatprep.subr.mxu0 0.0
    %375 = vmatpush1.msra.mxu0 0.0
    %376 = vmatprep.subr.mxu0 0.0
    %377 = vmatpush1.msra.mxu0 0.0
    %378 = vmatprep.subr.mxu0 0.0
    %379 = vmatpush1.msra.mxu0 0.0
    %380 = vmatprep.subr.mxu0 0.0
    %381 = vmatpush1.msra.mxu0 0.0
    %382 = vmatprep.subr.mxu0 0.0
    %383 = vmatpush1.msra.mxu0 0.0
    %384 = vmatprep.subr.mxu0 0.0
    %385 = vmatpush1.msra.mxu0 0.0
    %386 = vmatprep.subr.mxu0 0.0
    %387 = vmatpush1.msra.mxu0 0.0
    %388 = vmatprep.subr.mxu0 0.0
    %389 = vmatpush1.msra.mxu0 0.0
    %390 = vmatprep.subr.mxu0 0.0
    %391 = vmatpush1.msra.mxu0 0.0
    %392 = vmatprep.mubr.f32.mxu0 0.0
    %393 = vmatmul.mubr.f32.gmra.mrb[0].mxu0 %v326
    %v394 = vpop.f32.mrb[0].mxu0
    %v395 = vadd.f32 0.0, %v394
    %v396 = vpop.f32.mrb[0].mxu0
    %397 = vdwg.mxu0
    %v398 = vadd.f32 %v317, %v395
    %v399 = vxor.u32 %v398, 2147483648
    %v400 = vmul.f32 %v399, 1.442695
    %v401 = vpow.pop %v400
    %v402 = vadd.f32 %v401, 1.0
    %v403 = vrcp.pop %v402
    %v404 = vmul.f32 1.0, %v403
    %v405 = vtanh.pop %v398
    %v406 = vmul.f32 %v404, 0.0
    %408 = vrot.lane.b32.xlu0 %v405, 32
    %v409 = vpop.permute.xlu0 %408
    %v411 = vmul.f32 %v404, %v409
    %413 = vrot.lane.b32.xlu0 %v411, 32
    %v414 = vpop.permute.xlu0 %413
    %v416 = vadd.f32 %v406, %v414
    %v417 = vtanh.pop %v416
    %419 = vrot.lane.b32.xlu0 %v417, 32
    %v420 = vpop.permute.xlu0 %419
    %v422 = vmul.f32 %v404, %v420
    %424 = vrot.lane.b32.xlu0 %v422, 64
    %v425 = vpop.permute.xlu0 %424
    %v426 = vsel %vm243, %v425, 0
    %428 = vmatprep.subr.mxu0 0.0
    %429 = vmatpush1.msra.mxu0 %v129
    %430 = vmatprep.subr.mxu0 0.0
    %431 = vmatpush1.msra.mxu0 %v130
    %432 = vmatprep.subr.mxu0 0.0
    %433 = vmatpush1.msra.mxu0 %v131
    %434 = vmatprep.subr.mxu0 0.0
    %435 = vmatpush1.msra.mxu0 %v132
    %436 = vmatprep.subr.mxu0 0.0
    %437 = vmatpush1.msra.mxu0 0.0
    %438 = vmatprep.subr.mxu0 0.0
    %439 = vmatpush1.msra.mxu0 0.0
    %440 = vmatprep.subr.mxu0 0.0
    %441 = vmatpush1.msra.mxu0 0.0
    %442 = vmatprep.subr.mxu0 0.0
    %443 = vmatpush1.msra.mxu0 0.0
    %444 = vmatprep.subr.mxu0 0.0
    %445 = vmatpush1.msra.mxu0 0.0
    %446 = vmatprep.subr.mxu0 0.0
    %447 = vmatpush1.msra.mxu0 0.0
    %448 = vmatprep.subr.mxu0 0.0
    %449 = vmatpush1.msra.mxu0 0.0
    %450 = vmatprep.subr.mxu0 0.0
    %451 = vmatpush1.msra.mxu0 0.0
    %452 = vmatprep.subr.mxu0 0.0
    %453 = vmatpush1.msra.mxu0 0.0
    %454 = vmatprep.subr.mxu0 0.0
    %455 = vmatpush1.msra.mxu0 0.0
    %456 = vmatprep.subr.mxu0 0.0
    %457 = vmatpush1.msra.mxu0 0.0
    %458 = vmatprep.subr.mxu0 0.0
    %459 = vmatpush1.msra.mxu0 0.0
    %460 = vmatprep.subr.mxu0 0.0
    %461 = vmatpush1.msra.mxu0 0.0
    %462 = vmatprep.subr.mxu0 0.0
    %463 = vmatpush1.msra.mxu0 0.0
    %464 = vmatprep.subr.mxu0 0.0
    %465 = vmatpush1.msra.mxu0 0.0
    %466 = vmatprep.subr.mxu0 0.0
    %467 = vmatpush1.msra.mxu0 0.0
    %468 = vmatprep.subr.mxu0 0.0
    %469 = vmatpush1.msra.mxu0 0.0
    %470 = vmatprep.subr.mxu0 0.0
    %471 = vmatpush1.msra.mxu0 0.0
    %472 = vmatprep.subr.mxu0 0.0
    %473 = vmatpush1.msra.mxu0 0.0
    %474 = vmatprep.subr.mxu0 0.0
    %475 = vmatpush1.msra.mxu0 0.0
    %476 = vmatprep.subr.mxu0 0.0
    %477 = vmatpush1.msra.mxu0 0.0
    %478 = vmatprep.subr.mxu0 0.0
    %479 = vmatpush1.msra.mxu0 0.0
    %480 = vmatprep.subr.mxu0 0.0
    %481 = vmatpush1.msra.mxu0 0.0
    %482 = vmatprep.subr.mxu0 0.0
    %483 = vmatpush1.msra.mxu0 0.0
    %484 = vmatprep.subr.mxu0 0.0
    %485 = vmatpush1.msra.mxu0 0.0
    %486 = vmatprep.subr.mxu0 0.0
    %487 = vmatpush1.msra.mxu0 0.0
    %488 = vmatprep.subr.mxu0 0.0
    %489 = vmatpush1.msra.mxu0 0.0
    %490 = vmatprep.subr.mxu0 0.0
    %491 = vmatpush1.msra.mxu0 0.0
    %492 = vmatprep.mubr.f32.mxu0 0.0
    %493 = vmatmul.mubr.f32.gmra.mrb[0].mxu0 %v426
    %v494 = vpop.f32.mrb[0].mxu0
    %v495 = vadd.f32 0.0, %v494
    %v496 = vpop.f32.mrb[0].mxu0
    %497 = vdwg.mxu0
    %v499 = vrot.slane %v495, 6
    %v501 = vadd.f32 %v317, %v499
    %v502 = vxor.u32 %v501, 2147483648
    %v503 = vmul.f32 %v502, 1.442695
    %v504 = vpow.pop %v503
    %v505 = vadd.f32 %v504, 1.0
    %v506 = vrcp.pop %v505
    %v507 = vmul.f32 1.0, %v506
    %v508 = vtanh.pop %v501
    %v510 = vrot.slane %v416, 6
    %v512 = vmul.f32 %v507, %v510
    %514 = vrot.lane.b32.xlu0 %v508, 32
    %v515 = vpop.permute.xlu0 %514
    %v517 = vmul.f32 %v507, %v515
    %519 = vrot.lane.b32.xlu0 %v517, 32
    %v520 = vpop.permute.xlu0 %519
    %v522 = vadd.f32 %v512, %v520
    %v523 = vtanh.pop %v522
    %525 = vrot.lane.b32.xlu0 %v523, 32
    %v526 = vpop.permute.xlu0 %525
    %v528 = vmul.f32 %v507, %v526
    %v530 = vrot.slane %v528, 2
    %531 = vrot.lane.b32.xlu0 %v530, 64
    %v532 = vpop.permute.xlu0 %531
    %v533 = vsel %vm243, %v532, 0
    %535 = vmatprep.subr.mxu0 0.0
    %536 = vmatpush1.msra.mxu0 %v129
    %537 = vmatprep.subr.mxu0 0.0
    %538 = vmatpush1.msra.mxu0 %v130
    %539 = vmatprep.subr.mxu0 0.0
    %540 = vmatpush1.msra.mxu0 %v131
    %541 = vmatprep.subr.mxu0 0.0
    %542 = vmatpush1.msra.mxu0 %v132
    %543 = vmatprep.subr.mxu0 0.0
    %544 = vmatpush1.msra.mxu0 0.0
    %545 = vmatprep.subr.mxu0 0.0
    %546 = vmatpush1.msra.mxu0 0.0
    %547 = vmatprep.subr.mxu0 0.0
    %548 = vmatpush1.msra.mxu0 0.0
    %549 = vmatprep.subr.mxu0 0.0
    %550 = vmatpush1.msra.mxu0 0.0
    %551 = vmatprep.subr.mxu0 0.0
    %552 = vmatpush1.msra.mxu0 0.0
    %553 = vmatprep.subr.mxu0 0.0
    %554 = vmatpush1.msra.mxu0 0.0
    %555 = vmatprep.subr.mxu0 0.0
    %556 = vmatpush1.msra.mxu0 0.0
    %557 = vmatprep.subr.mxu0 0.0
    %558 = vmatpush1.msra.mxu0 0.0
    %559 = vmatprep.subr.mxu0 0.0
    %560 = vmatpush1.msra.mxu0 0.0
    %561 = vmatprep.subr.mxu0 0.0
    %562 = vmatpush1.msra.mxu0 0.0
    %563 = vmatprep.subr.mxu0 0.0
    %564 = vmatpush1.msra.mxu0 0.0
    %565 = vmatprep.subr.mxu0 0.0
    %566 = vmatpush1.msra.mxu0 0.0
    %567 = vmatprep.subr.mxu0 0.0
    %568 = vmatpush1.msra.mxu0 0.0
    %569 = vmatprep.subr.mxu0 0.0
    %570 = vmatpush1.msra.mxu0 0.0
    %571 = vmatprep.subr.mxu0 0.0
    %572 = vmatpush1.msra.mxu0 0.0
    %573 = vmatprep.subr.mxu0 0.0
    %574 = vmatpush1.msra.mxu0 0.0
    %575 = vmatprep.subr.mxu0 0.0
    %576 = vmatpush1.msra.mxu0 0.0
    %577 = vmatprep.subr.mxu0 0.0
    %578 = vmatpush1.msra.mxu0 0.0
    %579 = vmatprep.subr.mxu0 0.0
    %580 = vmatpush1.msra.mxu0 0.0
    %581 = vmatprep.subr.mxu0 0.0
    %582 = vmatpush1.msra.mxu0 0.0
    %583 = vmatprep.subr.mxu0 0.0
    %584 = vmatpush1.msra.mxu0 0.0
    %585 = vmatprep.subr.mxu0 0.0
    %586 = vmatpush1.msra.mxu0 0.0
    %587 = vmatprep.subr.mxu0 0.0
    %588 = vmatpush1.msra.mxu0 0.0
    %589 = vmatprep.subr.mxu0 0.0
    %590 = vmatpush1.msra.mxu0 0.0
    %591 = vmatprep.subr.mxu0 0.0
    %592 = vmatpush1.msra.mxu0 0.0
    %593 = vmatprep.subr.mxu0 0.0
    %594 = vmatpush1.msra.mxu0 0.0
    %595 = vmatprep.subr.mxu0 0.0
    %596 = vmatpush1.msra.mxu0 0.0
    %597 = vmatprep.subr.mxu0 0.0
    %598 = vmatpush1.msra.mxu0 0.0
    %599 = vmatprep.mubr.f32.mxu0 0.0
    %600 = vmatmul.mubr.f32.gmra.mrb[0].mxu0 %v533
    %v601 = vpop.f32.mrb[0].mxu0
    %v602 = vadd.f32 0.0, %v601
    %v603 = vpop.f32.mrb[0].mxu0
    %604 = vdwg.mxu0
    %v606 = vrot.slane %v602, 4
    %v608 = vadd.f32 %v317, %v606
    %v609 = vxor.u32 %v608, 2147483648
    %v610 = vmul.f32 %v609, 1.442695
    %v611 = vpow.pop %v610
    %v612 = vadd.f32 %v611, 1.0
    %v613 = vrcp.pop %v612
    %v614 = vmul.f32 1.0, %v613
    %v615 = vtanh.pop %v608
    %v617 = vrot.slane %v522, 6
    %v619 = vmul.f32 %v614, %v617
    %621 = vrot.lane.b32.xlu0 %v615, 32
    %v622 = vpop.permute.xlu0 %621
    %v624 = vmul.f32 %v614, %v622
    %626 = vrot.lane.b32.xlu0 %v624, 32
    %v627 = vpop.permute.xlu0 %626
    %v629 = vadd.f32 %v619, %v627
    %v630 = vtanh.pop %v629
    %632 = vrot.lane.b32.xlu0 %v630, 32
    %v633 = vpop.permute.xlu0 %632
    %v635 = vmul.f32 %v614, %v633
    %v637 = vrot.slane %v635, 4
    %638 = vrot.lane.b32.xlu0 %v637, 64
    %v639 = vpop.permute.xlu0 %638
    %v640 = vsel %vm243, %v639, 0
    %642 = vmatprep.subr.mxu0 0.0
    %643 = vmatpush1.msra.mxu0 %v129
    %644 = vmatprep.subr.mxu0 0.0
    %645 = vmatpush1.msra.mxu0 %v130
    %646 = vmatprep.subr.mxu0 0.0
    %647 = vmatpush1.msra.mxu0 %v131
    %648 = vmatprep.subr.mxu0 0.0
    %649 = vmatpush1.msra.mxu0 %v132
    %650 = vmatprep.subr.mxu0 0.0
    %651 = vmatpush1.msra.mxu0 0.0
    %652 = vmatprep.subr.mxu0 0.0
    %653 = vmatpush1.msra.mxu0 0.0
    %654 = vmatprep.subr.mxu0 0.0
    %655 = vmatpush1.msra.mxu0 0.0
    %656 = vmatprep.subr.mxu0 0.0
    %657 = vmatpush1.msra.mxu0 0.0
    %658 = vmatprep.subr.mxu0 0.0
    %659 = vmatpush1.msra.mxu0 0.0
    %660 = vmatprep.subr.mxu0 0.0
    %661 = vmatpush1.msra.mxu0 0.0
    %662 = vmatprep.subr.mxu0 0.0
    %663 = vmatpush1.msra.mxu0 0.0
    %664 = vmatprep.subr.mxu0 0.0
    %665 = vmatpush1.msra.mxu0 0.0
    %666 = vmatprep.subr.mxu0 0.0
    %667 = vmatpush1.msra.mxu0 0.0
    %668 = vmatprep.subr.mxu0 0.0
    %669 = vmatpush1.msra.mxu0 0.0
    %670 = vmatprep.subr.mxu0 0.0
    %671 = vmatpush1.msra.mxu0 0.0
    %672 = vmatprep.subr.mxu0 0.0
    %673 = vmatpush1.msra.mxu0 0.0
    %674 = vmatprep.subr.mxu0 0.0
    %675 = vmatpush1.msra.mxu0 0.0
    %676 = vmatprep.subr.mxu0 0.0
    %677 = vmatpush1.msra.mxu0 0.0
    %678 = vmatprep.subr.mxu0 0.0
    %679 = vmatpush1.msra.mxu0 0.0
    %680 = vmatprep.subr.mxu0 0.0
    %681 = vmatpush1.msra.mxu0 0.0
    %682 = vmatprep.subr.mxu0 0.0
    %683 = vmatpush1.msra.mxu0 0.0
    %684 = vmatprep.subr.mxu0 0.0
    %685 = vmatpush1.msra.mxu0 0.0
    %686 = vmatprep.subr.mxu0 0.0
    %687 = vmatpush1.msra.mxu0 0.0
    %688 = vmatprep.subr.mxu0 0.0
    %689 = vmatpush1.msra.mxu0 0.0
    %690 = vmatprep.subr.mxu0 0.0
    %691 = vmatpush1.msra.mxu0 0.0
    %692 = vmatprep.subr.mxu0 0.0
    %693 = vmatpush1.msra.mxu0 0.0
    %694 = vmatprep.subr.mxu0 0.0
    %695 = vmatpush1.msra.mxu0 0.0
    %696 = vmatprep.subr.mxu0 0.0
    %697 = vmatpush1.msra.mxu0 0.0
    %698 = vmatprep.subr.mxu0 0.0
    %699 = vmatpush1.msra.mxu0 0.0
    %700 = vmatprep.subr.mxu0 0.0
    %701 = vmatpush1.msra.mxu0 0.0
    %702 = vmatprep.subr.mxu0 0.0
    %703 = vmatpush1.msra.mxu0 0.0
    %704 = vmatprep.subr.mxu0 0.0
    %705 = vmatpush1.msra.mxu0 0.0
    %706 = vmatprep.mubr.f32.mxu0 0.0
    %707 = vmatmul.mubr.f32.gmra.mrb[0].mxu0 %v640
    %v708 = vpop.f32.mrb[0].mxu0
    %v709 = vadd.f32 0.0, %v708
    %v710 = vpop.f32.mrb[0].mxu0
    %711 = vdwg.mxu0
    %v713 = vrot.slane %v709, 2
    %v715 = vadd.f32 %v317, %v713
    %v716 = vxor.u32 %v715, 2147483648
    %v717 = vmul.f32 %v716, 1.442695
    %v718 = vpow.pop %v717
    %v719 = vadd.f32 %v718, 1.0
    %v720 = vrcp.pop %v719
    %v721 = vmul.f32 1.0, %v720
    %v722 = vtanh.pop %v715
    %v724 = vrot.slane %v629, 6
    %v726 = vmul.f32 %v721, %v724
    %728 = vrot.lane.b32.xlu0 %v722, 32
    %v729 = vpop.permute.xlu0 %728
    %v731 = vmul.f32 %v721, %v729
    %733 = vrot.lane.b32.xlu0 %v731, 32
    %v734 = vpop.permute.xlu0 %733
    %v736 = vadd.f32 %v726, %v734
    %v737 = vtanh.pop %v736
    %739 = vrot.lane.b32.xlu0 %v737, 32
    %v740 = vpop.permute.xlu0 %739
    %v742 = vmul.f32 %v721, %v740
    %v744 = vrot.slane %v742, 6
    %745 = vrot.lane.b32.xlu0 %v744, 64
    %v746 = vpop.permute.xlu0 %745
    %v747 = vsel %vm243, %v746, 0
    %749 = vmatprep.subr.mxu0 0.0
    %750 = vmatpush1.msra.mxu0 %v129
    %751 = vmatprep.subr.mxu0 0.0
    %752 = vmatpush1.msra.mxu0 %v130
    %753 = vmatprep.subr.mxu0 0.0
    %754 = vmatpush1.msra.mxu0 %v131
    %755 = vmatprep.subr.mxu0 0.0
    %756 = vmatpush1.msra.mxu0 %v132
    %757 = vmatprep.subr.mxu0 0.0
    %758 = vmatpush1.msra.mxu0 0.0
    %759 = vmatprep.subr.mxu0 0.0
    %760 = vmatpush1.msra.mxu0 0.0
    %761 = vmatprep.subr.mxu0 0.0
    %762 = vmatpush1.msra.mxu0 0.0
    %763 = vmatprep.subr.mxu0 0.0
    %764 = vmatpush1.msra.mxu0 0.0
    %765 = vmatprep.subr.mxu0 0.0
    %766 = vmatpush1.msra.mxu0 0.0
    %767 = vmatprep.subr.mxu0 0.0
    %768 = vmatpush1.msra.mxu0 0.0
    %769 = vmatprep.subr.mxu0 0.0
    %770 = vmatpush1.msra.mxu0 0.0
    %771 = vmatprep.subr.mxu0 0.0
    %772 = vmatpush1.msra.mxu0 0.0
    %773 = vmatprep.subr.mxu0 0.0
    %774 = vmatpush1.msra.mxu0 0.0
    %775 = vmatprep.subr.mxu0 0.0
    %776 = vmatpush1.msra.mxu0 0.0
    %777 = vmatprep.subr.mxu0 0.0
    %778 = vmatpush1.msra.mxu0 0.0
    %779 = vmatprep.subr.mxu0 0.0
    %780 = vmatpush1.msra.mxu0 0.0
    %781 = vmatprep.subr.mxu0 0.0
    %782 = vmatpush1.msra.mxu0 0.0
    %783 = vmatprep.subr.mxu0 0.0
    %784 = vmatpush1.msra.mxu0 0.0
    %785 = vmatprep.subr.mxu0 0.0
    %786 = vmatpush1.msra.mxu0 0.0
    %787 = vmatprep.subr.mxu0 0.0
    %788 = vmatpush1.msra.mxu0 0.0
    %789 = vmatprep.subr.mxu0 0.0
    %790 = vmatpush1.msra.mxu0 0.0
    %791 = vmatprep.subr.mxu0 0.0
    %792 = vmatpush1.msra.mxu0 0.0
    %793 = vmatprep.subr.mxu0 0.0
    %794 = vmatpush1.msra.mxu0 0.0
    %795 = vmatprep.subr.mxu0 0.0
    %796 = vmatpush1.msra.mxu0 0.0
    %797 = vmatprep.subr.mxu0 0.0
    %798 = vmatpush1.msra.mxu0 0.0
    %799 = vmatprep.subr.mxu0 0.0
    %800 = vmatpush1.msra.mxu0 0.0
    %801 = vmatprep.subr.mxu0 0.0
    %802 = vmatpush1.msra.mxu0 0.0
    %803 = vmatprep.subr.mxu0 0.0
    %804 = vmatpush1.msra.mxu0 0.0
    %805 = vmatprep.subr.mxu0 0.0
    %806 = vmatpush1.msra.mxu0 0.0
    %807 = vmatprep.subr.mxu0 0.0
    %808 = vmatpush1.msra.mxu0 0.0
    %809 = vmatprep.subr.mxu0 0.0
    %810 = vmatpush1.msra.mxu0 0.0
    %811 = vmatprep.subr.mxu0 0.0
    %812 = vmatpush1.msra.mxu0 0.0
    %813 = vmatprep.mubr.f32.mxu0 0.0
    %814 = vmatmul.mubr.f32.gmra.mrb[0].mxu0 %v747
    %v815 = vpop.f32.mrb[0].mxu0
    %v816 = vadd.f32 0.0, %v815
    %v817 = vpop.f32.mrb[0].mxu0
    %818 = vdwg.mxu0
    %v819 = vadd.f32 %v322, %v816
    %v820 = vxor.u32 %v819, 2147483648
    %v821 = vmul.f32 %v820, 1.442695
    %v822 = vpow.pop %v821
    %v823 = vadd.f32 %v822, 1.0
    %v824 = vrcp.pop %v823
    %v825 = vmul.f32 1.0, %v824
    %v826 = vtanh.pop %v819
    %v828 = vrot.slane %v736, 6
    %v830 = vmul.f32 %v825, %v828
    %832 = vrot.lane.b32.xlu0 %v826, 32
    %v833 = vpop.permute.xlu0 %832
    %v835 = vmul.f32 %v825, %v833
    %837 = vrot.lane.b32.xlu0 %v835, 32
    %v838 = vpop.permute.xlu0 %837
    %v840 = vadd.f32 %v830, %v838
    %v841 = vtanh.pop %v840
    %843 = vrot.lane.b32.xlu0 %v841, 32
    %v844 = vpop.permute.xlu0 %843
    %v846 = vmul.f32 %v825, %v844
    %848 = vrot.lane.b32.xlu0 %v846, 64
    %v849 = vpop.permute.xlu0 %848
    %v850 = vsel %vm243, %v849, 0
    %852 = vmatprep.subr.mxu0 0.0
    %853 = vmatpush1.msra.mxu0 %v129
    %854 = vmatprep.subr.mxu0 0.0
    %855 = vmatpush1.msra.mxu0 %v130
    %856 = vmatprep.subr.mxu0 0.0
    %857 = vmatpush1.msra.mxu0 %v131
    %858 = vmatprep.subr.mxu0 0.0
    %859 = vmatpush1.msra.mxu0 %v132
    %860 = vmatprep.subr.mxu0 0.0
    %861 = vmatpush1.msra.mxu0 0.0
    %862 = vmatprep.subr.mxu0 0.0
    %863 = vmatpush1.msra.mxu0 0.0
    %864 = vmatprep.subr.mxu0 0.0
    %865 = vmatpush1.msra.mxu0 0.0
    %866 = vmatprep.subr.mxu0 0.0
    %867 = vmatpush1.msra.mxu0 0.0
    %868 = vmatprep.subr.mxu0 0.0
    %869 = vmatpush1.msra.mxu0 0.0
    %870 = vmatprep.subr.mxu0 0.0
    %871 = vmatpush1.msra.mxu0 0.0
    %872 = vmatprep.subr.mxu0 0.0
    %873 = vmatpush1.msra.mxu0 0.0
    %874 = vmatprep.subr.mxu0 0.0
    %875 = vmatpush1.msra.mxu0 0.0
    %876 = vmatprep.subr.mxu0 0.0
    %877 = vmatpush1.msra.mxu0 0.0
    %878 = vmatprep.subr.mxu0 0.0
    %879 = vmatpush1.msra.mxu0 0.0
    %880 = vmatprep.subr.mxu0 0.0
    %881 = vmatpush1.msra.mxu0 0.0
    %882 = vmatprep.subr.mxu0 0.0
    %883 = vmatpush1.msra.mxu0 0.0
    %884 = vmatprep.subr.mxu0 0.0
    %885 = vmatpush1.msra.mxu0 0.0
    %886 = vmatprep.subr.mxu0 0.0
    %887 = vmatpush1.msra.mxu0 0.0
    %888 = vmatprep.subr.mxu0 0.0
    %889 = vmatpush1.msra.mxu0 0.0
    %890 = vmatprep.subr.mxu0 0.0
    %891 = vmatpush1.msra.mxu0 0.0
    %892 = vmatprep.subr.mxu0 0.0
    %893 = vmatpush1.msra.mxu0 0.0
    %894 = vmatprep.subr.mxu0 0.0
    %895 = vmatpush1.msra.mxu0 0.0
    %896 = vmatprep.subr.mxu0 0.0
    %897 = vmatpush1.msra.mxu0 0.0
    %898 = vmatprep.subr.mxu0 0.0
    %899 = vmatpush1.msra.mxu0 0.0
    %900 = vmatprep.subr.mxu0 0.0
    %901 = vmatpush1.msra.mxu0 0.0
    %902 = vmatprep.subr.mxu0 0.0
    %903 = vmatpush1.msra.mxu0 0.0
    %904 = vmatprep.subr.mxu0 0.0
    %905 = vmatpush1.msra.mxu0 0.0
    %906 = vmatprep.subr.mxu0 0.0
    %907 = vmatpush1.msra.mxu0 0.0
    %908 = vmatprep.subr.mxu0 0.0
    %909 = vmatpush1.msra.mxu0 0.0
    %910 = vmatprep.subr.mxu0 0.0
    %911 = vmatpush1.msra.mxu0 0.0
    %912 = vmatprep.subr.mxu0 0.0
    %913 = vmatpush1.msra.mxu0 0.0
    %914 = vmatprep.subr.mxu0 0.0
    %915 = vmatpush1.msra.mxu0 0.0
    %916 = vmatprep.mubr.f32.mxu0 0.0
    %917 = vmatmul.mubr.f32.gmra.mrb[0].mxu0 %v850
    %v918 = vpop.f32.mrb[0].mxu0
    %v919 = vadd.f32 0.0, %v918
    %v920 = vpop.f32.mrb[0].mxu0
    %921 = vdwg.mxu0
    %v923 = vrot.slane %v919, 6
    %v925 = vadd.f32 %v322, %v923
    %v926 = vxor.u32 %v925, 2147483648
    %v927 = vmul.f32 %v926, 1.442695
    %v928 = vpow.pop %v927
    %v929 = vadd.f32 %v928, 1.0
    %v930 = vrcp.pop %v929
    %v931 = vmul.f32 1.0, %v930
    %v932 = vtanh.pop %v925
    %v934 = vrot.slane %v840, 6
    %v936 = vmul.f32 %v931, %v934
    %938 = vrot.lane.b32.xlu0 %v932, 32
    %v939 = vpop.permute.xlu0 %938
    %v941 = vmul.f32 %v931, %v939
    %943 = vrot.lane.b32.xlu0 %v941, 32
    %v944 = vpop.permute.xlu0 %943
    %v946 = vadd.f32 %v936, %v944
    %v947 = vtanh.pop %v946
    %949 = vrot.lane.b32.xlu0 %v947, 32
    %v950 = vpop.permute.xlu0 %949
    %v952 = vmul.f32 %v931, %v950
    %v954 = vrot.slane %v952, 2
    %955 = vrot.lane.b32.xlu0 %v954, 64
    %v956 = vpop.permute.xlu0 %955
    %v957 = vsel %vm243, %v956, 0
    %959 = vmatprep.subr.mxu0 0.0
    %960 = vmatpush1.msra.mxu0 %v129
    %961 = vmatprep.subr.mxu0 0.0
    %962 = vmatpush1.msra.mxu0 %v130
    %963 = vmatprep.subr.mxu0 0.0
    %964 = vmatpush1.msra.mxu0 %v131
    %965 = vmatprep.subr.mxu0 0.0
    %966 = vmatpush1.msra.mxu0 %v132
    %967 = vmatprep.subr.mxu0 0.0
    %968 = vmatpush1.msra.mxu0 0.0
    %969 = vmatprep.subr.mxu0 0.0
    %970 = vmatpush1.msra.mxu0 0.0
    %971 = vmatprep.subr.mxu0 0.0
    %972 = vmatpush1.msra.mxu0 0.0
    %973 = vmatprep.subr.mxu0 0.0
    %974 = vmatpush1.msra.mxu0 0.0
    %975 = vmatprep.subr.mxu0 0.0
    %976 = vmatpush1.msra.mxu0 0.0
    %977 = vmatprep.subr.mxu0 0.0
    %978 = vmatpush1.msra.mxu0 0.0
    %979 = vmatprep.subr.mxu0 0.0
    %980 = vmatpush1.msra.mxu0 0.0
    %981 = vmatprep.subr.mxu0 0.0
    %982 = vmatpush1.msra.mxu0 0.0
    %983 = vmatprep.subr.mxu0 0.0
    %984 = vmatpush1.msra.mxu0 0.0
    %985 = vmatprep.subr.mxu0 0.0
    %986 = vmatpush1.msra.mxu0 0.0
    %987 = vmatprep.subr.mxu0 0.0
    %988 = vmatpush1.msra.mxu0 0.0
    %989 = vmatprep.subr.mxu0 0.0
    %990 = vmatpush1.msra.mxu0 0.0
    %991 = vmatprep.subr.mxu0 0.0
    %992 = vmatpush1.msra.mxu0 0.0
    %993 = vmatprep.subr.mxu0 0.0
    %994 = vmatpush1.msra.mxu0 0.0
    %995 = vmatprep.subr.mxu0 0.0
    %996 = vmatpush1.msra.mxu0 0.0
    %997 = vmatprep.subr.mxu0 0.0
    %998 = vmatpush1.msra.mxu0 0.0
    %999 = vmatprep.subr.mxu0 0.0
    %1000 = vmatpush1.msra.mxu0 0.0
    %1001 = vmatprep.subr.mxu0 0.0
    %1002 = vmatpush1.msra.mxu0 0.0
    %1003 = vmatprep.subr.mxu0 0.0
    %1004 = vmatpush1.msra.mxu0 0.0
    %1005 = vmatprep.subr.mxu0 0.0
    %1006 = vmatpush1.msra.mxu0 0.0
    %1007 = vmatprep.subr.mxu0 0.0
    %1008 = vmatpush1.msra.mxu0 0.0
    %1009 = vmatprep.subr.mxu0 0.0
    %1010 = vmatpush1.msra.mxu0 0.0
    %1011 = vmatprep.subr.mxu0 0.0
    %1012 = vmatpush1.msra.mxu0 0.0
    %1013 = vmatprep.subr.mxu0 0.0
    %1014 = vmatpush1.msra.mxu0 0.0
    %1015 = vmatprep.subr.mxu0 0.0
    %1016 = vmatpush1.msra.mxu0 0.0
    %1017 = vmatprep.subr.mxu0 0.0
    %1018 = vmatpush1.msra.mxu0 0.0
    %1019 = vmatprep.subr.mxu0 0.0
    %1020 = vmatpush1.msra.mxu0 0.0
    %1021 = vmatprep.subr.mxu0 0.0
    %1022 = vmatpush1.msra.mxu0 0.0
    %1023 = vmatprep.mubr.f32.mxu0 0.0
    %1024 = vmatmul.mubr.f32.gmra.mrb[0].mxu0 %v957
    %v1025 = vpop.f32.mrb[0].mxu0
    %v1026 = vadd.f32 0.0, %v1025
    %v1027 = vpop.f32.mrb[0].mxu0
    %1028 = vdwg.mxu0
    %v1030 = vrot.slane %v1026, 4
    %v1032 = vadd.f32 %v322, %v1030
    %v1033 = vxor.u32 %v1032, 2147483648
    %v1034 = vmul.f32 %v1033, 1.442695
    %v1035 = vpow.pop %v1034
    %v1036 = vadd.f32 %v1035, 1.0
    %v1037 = vrcp.pop %v1036
    %v1038 = vmul.f32 1.0, %v1037
    %v1039 = vtanh.pop %v1032
    %v1041 = vrot.slane %v946, 6
    %v1043 = vmul.f32 %v1038, %v1041
    %1045 = vrot.lane.b32.xlu0 %v1039, 32
    %v1046 = vpop.permute.xlu0 %1045
    %v1048 = vmul.f32 %v1038, %v1046
    %1050 = vrot.lane.b32.xlu0 %v1048, 32
    %v1051 = vpop.permute.xlu0 %1050
    %v1053 = vadd.f32 %v1043, %v1051
    %v1054 = vtanh.pop %v1053
    %1056 = vrot.lane.b32.xlu0 %v1054, 32
    %v1057 = vpop.permute.xlu0 %1056
    %v1059 = vmul.f32 %v1038, %v1057
    %v1061 = vrot.slane %v1059, 4
    %1062 = vrot.lane.b32.xlu0 %v1061, 64
    %v1063 = vpop.permute.xlu0 %1062
    %v1064 = vsel %vm243, %v1063, 0
    %1066 = vmatprep.subr.mxu0 0.0
    %1067 = vmatpush1.msra.mxu0 %v129
    %1068 = vmatprep.subr.mxu0 0.0
    %1069 = vmatpush1.msra.mxu0 %v130
    %1070 = vmatprep.subr.mxu0 0.0
    %1071 = vmatpush1.msra.mxu0 %v131
    %1072 = vmatprep.subr.mxu0 0.0
    %1073 = vmatpush1.msra.mxu0 %v132
    %1074 = vmatprep.subr.mxu0 0.0
    %1075 = vmatpush1.msra.mxu0 0.0
    %1076 = vmatprep.subr.mxu0 0.0
    %1077 = vmatpush1.msra.mxu0 0.0
    %1078 = vmatprep.subr.mxu0 0.0
    %1079 = vmatpush1.msra.mxu0 0.0
    %1080 = vmatprep.subr.mxu0 0.0
    %1081 = vmatpush1.msra.mxu0 0.0
    %1082 = vmatprep.subr.mxu0 0.0
    %1083 = vmatpush1.msra.mxu0 0.0
    %1084 = vmatprep.subr.mxu0 0.0
    %1085 = vmatpush1.msra.mxu0 0.0
    %1086 = vmatprep.subr.mxu0 0.0
    %1087 = vmatpush1.msra.mxu0 0.0
    %1088 = vmatprep.subr.mxu0 0.0
    %1089 = vmatpush1.msra.mxu0 0.0
    %1090 = vmatprep.subr.mxu0 0.0
    %1091 = vmatpush1.msra.mxu0 0.0
    %1092 = vmatprep.subr.mxu0 0.0
    %1093 = vmatpush1.msra.mxu0 0.0
    %1094 = vmatprep.subr.mxu0 0.0
    %1095 = vmatpush1.msra.mxu0 0.0
    %1096 = vmatprep.subr.mxu0 0.0
    %1097 = vmatpush1.msra.mxu0 0.0
    %1098 = vmatprep.subr.mxu0 0.0
    %1099 = vmatpush1.msra.mxu0 0.0
    %1100 = vmatprep.subr.mxu0 0.0
    %1101 = vmatpush1.msra.mxu0 0.0
    %1102 = vmatprep.subr.mxu0 0.0
    %1103 = vmatpush1.msra.mxu0 0.0
    %1104 = vmatprep.subr.mxu0 0.0
    %1105 = vmatpush1.msra.mxu0 0.0
    %1106 = vmatprep.subr.mxu0 0.0
    %1107 = vmatpush1.msra.mxu0 0.0
    %1108 = vmatprep.subr.mxu0 0.0
    %1109 = vmatpush1.msra.mxu0 0.0
    %1110 = vmatprep.subr.mxu0 0.0
    %1111 = vmatpush1.msra.mxu0 0.0
    %1112 = vmatprep.subr.mxu0 0.0
    %1113 = vmatpush1.msra.mxu0 0.0
    %1114 = vmatprep.subr.mxu0 0.0
    %1115 = vmatpush1.msra.mxu0 0.0
    %1116 = vmatprep.subr.mxu0 0.0
    %1117 = vmatpush1.msra.mxu0 0.0
    %1118 = vmatprep.subr.mxu0 0.0
    %1119 = vmatpush1.msra.mxu0 0.0
    %1120 = vmatprep.subr.mxu0 0.0
    %1121 = vmatpush1.msra.mxu0 0.0
    %1122 = vmatprep.subr.mxu0 0.0
    %1123 = vmatpush1.msra.mxu0 0.0
    %1124 = vmatprep.subr.mxu0 0.0
    %1125 = vmatpush1.msra.mxu0 0.0
    %1126 = vmatprep.subr.mxu0 0.0
    %1127 = vmatpush1.msra.mxu0 0.0
    %1128 = vmatprep.subr.mxu0 0.0
    %1129 = vmatpush1.msra.mxu0 0.0
    %1130 = vmatprep.mubr.f32.mxu0 0.0
    %1131 = vmatmul.mubr.f32.gmra.mrb[0].mxu0 %v1064
    %v1132 = vpop.f32.mrb[0].mxu0
    %v1133 = vadd.f32 0.0, %v1132
    %v1134 = vpop.f32.mrb[0].mxu0
    %1135 = vdwg.mxu0
    %v1137 = vrot.slane %v1133, 2
    %v1139 = vadd.f32 %v322, %v1137
    %v1140 = vxor.u32 %v1139, 2147483648
    %v1141 = vmul.f32 %v1140, 1.442695
    %v1142 = vpow.pop %v1141
    %v1143 = vadd.f32 %v1142, 1.0
    %v1144 = vrcp.pop %v1143
    %v1145 = vmul.f32 1.0, %v1144
    %v1146 = vtanh.pop %v1139
    %v1148 = vrot.slane %v1053, 6
    %v1150 = vmul.f32 %v1145, %v1148
    %1152 = vrot.lane.b32.xlu0 %v1146, 32
    %v1153 = vpop.permute.xlu0 %1152
    %v1155 = vmul.f32 %v1145, %v1153
    %1157 = vrot.lane.b32.xlu0 %v1155, 32
    %v1158 = vpop.permute.xlu0 %1157
    %v1160 = vadd.f32 %v1150, %v1158
    %v1161 = vtanh.pop %v1160
    %1163 = vrot.lane.b32.xlu0 %v1161, 32
    %v1164 = vpop.permute.xlu0 %1163
    %v1166 = vmul.f32 %v1145, %v1164
    %v1167 = vld [vmem:[#allocation11] sm:$0xff]
    %v1168 = vld [vmem:[#allocation11 + $0x8] sm:$0xff]
    %v1169 = vld [vmem:[#allocation11 + $0x10] sm:$0xff]
    %v1170 = vld [vmem:[#allocation11 + $0x18] sm:$0xff]
    %v1171 = vld [vmem:[#allocation13] sm:$0x1]
    %v1173 = vlaneseq
    %v1174 = vshrl.u32 %v1173, 7
    %v1175 = vsub.s32 0, %v1174
    %v1176 = vrot.slane %v1171, %v1175
    %v1179 = vrot.slane %v1166, 6
    %1180 = vrot.lane.b32.xlu0 %v1179, 64
    %v1181 = vpop.permute.xlu0 %1180
    %v1182 = vsel %vm243, %v1181, 0
    %1184 = vmatprep.subr.mxu0 0.0
    %1185 = vmatpush1.msra.mxu0 %v1167
    %1186 = vmatprep.subr.mxu0 0.0
    %1187 = vmatpush1.msra.mxu0 %v1168
    %1188 = vmatprep.subr.mxu0 0.0
    %1189 = vmatpush1.msra.mxu0 %v1169
    %1190 = vmatprep.subr.mxu0 0.0
    %1191 = vmatpush1.msra.mxu0 %v1170
    %1192 = vmatprep.subr.mxu0 0.0
    %1193 = vmatpush1.msra.mxu0 0.0
    %1194 = vmatprep.subr.mxu0 0.0
    %1195 = vmatpush1.msra.mxu0 0.0
    %1196 = vmatprep.subr.mxu0 0.0
    %1197 = vmatpush1.msra.mxu0 0.0
    %1198 = vmatprep.subr.mxu0 0.0
    %1199 = vmatpush1.msra.mxu0 0.0
    %1200 = vmatprep.subr.mxu0 0.0
    %1201 = vmatpush1.msra.mxu0 0.0
    %1202 = vmatprep.subr.mxu0 0.0
    %1203 = vmatpush1.msra.mxu0 0.0
    %1204 = vmatprep.subr.mxu0 0.0
    %1205 = vmatpush1.msra.mxu0 0.0
    %1206 = vmatprep.subr.mxu0 0.0
    %1207 = vmatpush1.msra.mxu0 0.0
    %1208 = vmatprep.subr.mxu0 0.0
    %1209 = vmatpush1.msra.mxu0 0.0
    %1210 = vmatprep.subr.mxu0 0.0
    %1211 = vmatpush1.msra.mxu0 0.0
    %1212 = vmatprep.subr.mxu0 0.0
    %1213 = vmatpush1.msra.mxu0 0.0
    %1214 = vmatprep.subr.mxu0 0.0
    %1215 = vmatpush1.msra.mxu0 0.0
    %1216 = vmatprep.subr.mxu0 0.0
    %1217 = vmatpush1.msra.mxu0 0.0
    %1218 = vmatprep.subr.mxu0 0.0
    %1219 = vmatpush1.msra.mxu0 0.0
    %1220 = vmatprep.subr.mxu0 0.0
    %1221 = vmatpush1.msra.mxu0 0.0
    %1222 = vmatprep.subr.mxu0 0.0
    %1223 = vmatpush1.msra.mxu0 0.0
    %1224 = vmatprep.subr.mxu0 0.0
    %1225 = vmatpush1.msra.mxu0 0.0
    %1226 = vmatprep.subr.mxu0 0.0
    %1227 = vmatpush1.msra.mxu0 0.0
    %1228 = vmatprep.subr.mxu0 0.0
    %1229 = vmatpush1.msra.mxu0 0.0
    %1230 = vmatprep.subr.mxu0 0.0
    %1231 = vmatpush1.msra.mxu0 0.0
    %1232 = vmatprep.subr.mxu0 0.0
    %1233 = vmatpush1.msra.mxu0 0.0
    %1234 = vmatprep.subr.mxu0 0.0
    %1235 = vmatpush1.msra.mxu0 0.0
    %1236 = vmatprep.subr.mxu0 0.0
    %1237 = vmatpush1.msra.mxu0 0.0
    %1238 = vmatprep.subr.mxu0 0.0
    %1239 = vmatpush1.msra.mxu0 0.0
    %1240 = vmatprep.subr.mxu0 0.0
    %1241 = vmatpush1.msra.mxu0 0.0
    %1242 = vmatprep.subr.mxu0 0.0
    %1243 = vmatpush1.msra.mxu0 0.0
    %1244 = vmatprep.subr.mxu0 0.0
    %1245 = vmatpush1.msra.mxu0 0.0
    %1246 = vmatprep.subr.mxu0 0.0
    %1247 = vmatpush1.msra.mxu0 0.0
    %1248 = vmatprep.mubr.f32.mxu0 0.0
    %1249 = vmatmul.mubr.f32.gmra.mrb[0].mxu0 %v1182
    %v1250 = vpop.f32.mrb[0].mxu0
    %v1251 = vadd.f32 %v1176, %v1250
    %v1252 = vpop.f32.mrb[0].mxu0
    %1253 = vdwg.mxu0
    %vm1254 = vcmp.gt.f32.partialorder %v1251, 0.0
    %v1255 = vmul.f32 %v1251, 0.01
    %v1256 = vsel %vm1254, %v1251, %v1255
    %v1257 = vld [vmem:[%s10] sm:$0xff]
    %v1258 = vld [vmem:[%s10 + $0x8] sm:$0xff]
    %v1259 = vld [vmem:[%s10 + $0x10] sm:$0xff]
    %v1260 = vld [vmem:[%s10 + $0x18] sm:$0xff]
    %v1261 = vld [vmem:[%s11] sm:$0x1]
    %v1263 = vlaneseq
    %v1264 = vshrl.u32 %v1263, 7
    %v1265 = vsub.s32 0, %v1264
    %v1266 = vrot.slane %v1261, %v1265
    %v1269 = vsel %vm243, %v1256, 0
    %1271 = vmatprep.subr.mxu0 0.0
    %1272 = vmatpush1.msra.mxu0 %v1257
    %1273 = vmatprep.subr.mxu0 0.0
    %1274 = vmatpush1.msra.mxu0 %v1258
    %1275 = vmatprep.subr.mxu0 0.0
    %1276 = vmatpush1.msra.mxu0 %v1259
    %1277 = vmatprep.subr.mxu0 0.0
    %1278 = vmatpush1.msra.mxu0 %v1260
    %1279 = vmatprep.subr.mxu0 0.0
    %1280 = vmatpush1.msra.mxu0 0.0
    %1281 = vmatprep.subr.mxu0 0.0
    %1282 = vmatpush1.msra.mxu0 0.0
    %1283 = vmatprep.subr.mxu0 0.0
    %1284 = vmatpush1.msra.mxu0 0.0
    %1285 = vmatprep.subr.mxu0 0.0
    %1286 = vmatpush1.msra.mxu0 0.0
    %1287 = vmatprep.subr.mxu0 0.0
    %1288 = vmatpush1.msra.mxu0 0.0
    %1289 = vmatprep.subr.mxu0 0.0
    %1290 = vmatpush1.msra.mxu0 0.0
    %1291 = vmatprep.subr.mxu0 0.0
    %1292 = vmatpush1.msra.mxu0 0.0
    %1293 = vmatprep.subr.mxu0 0.0
    %1294 = vmatpush1.msra.mxu0 0.0
    %1295 = vmatprep.subr.mxu0 0.0
    %1296 = vmatpush1.msra.mxu0 0.0
    %1297 = vmatprep.subr.mxu0 0.0
    %1298 = vmatpush1.msra.mxu0 0.0
    %1299 = vmatprep.subr.mxu0 0.0
    %1300 = vmatpush1.msra.mxu0 0.0
    %1301 = vmatprep.subr.mxu0 0.0
    %1302 = vmatpush1.msra.mxu0 0.0
    %1303 = vmatprep.subr.mxu0 0.0
    %1304 = vmatpush1.msra.mxu0 0.0
    %1305 = vmatprep.subr.mxu0 0.0
    %1306 = vmatpush1.msra.mxu0 0.0
    %1307 = vmatprep.subr.mxu0 0.0
    %1308 = vmatpush1.msra.mxu0 0.0
    %1309 = vmatprep.subr.mxu0 0.0
    %1310 = vmatpush1.msra.mxu0 0.0
    %1311 = vmatprep.subr.mxu0 0.0
    %1312 = vmatpush1.msra.mxu0 0.0
    %1313 = vmatprep.subr.mxu0 0.0
    %1314 = vmatpush1.msra.mxu0 0.0
    %1315 = vmatprep.subr.mxu0 0.0
    %1316 = vmatpush1.msra.mxu0 0.0
    %1317 = vmatprep.subr.mxu0 0.0
    %1318 = vmatpush1.msra.mxu0 0.0
    %1319 = vmatprep.subr.mxu0 0.0
    %1320 = vmatpush1.msra.mxu0 0.0
    %1321 = vmatprep.subr.mxu0 0.0
    %1322 = vmatpush1.msra.mxu0 0.0
    %1323 = vmatprep.subr.mxu0 0.0
    %1324 = vmatpush1.msra.mxu0 0.0
    %1325 = vmatprep.subr.mxu0 0.0
    %1326 = vmatpush1.msra.mxu0 0.0
    %1327 = vmatprep.subr.mxu0 0.0
    %1328 = vmatpush1.msra.mxu0 0.0
    %1329 = vmatprep.subr.mxu0 0.0
    %1330 = vmatpush1.msra.mxu0 0.0
    %1331 = vmatprep.subr.mxu0 0.0
    %1332 = vmatpush1.msra.mxu0 0.0
    %1333 = vmatprep.subr.mxu0 0.0
    %1334 = vmatpush1.msra.mxu0 0.0
    %1335 = vmatprep.mubr.f32.mxu0 0.0
    %1336 = vmatmul.mubr.f32.gmra.mrb[0].mxu0 %v1269
    %v1337 = vpop.f32.mrb[0].mxu0
    %v1338 = vadd.f32 %v1266, %v1337
    %v1339 = vpop.f32.mrb[0].mxu0
    %1340 = vdwg.mxu0
    %v1341 = vld [vmem:[%s1] sm:$0x3]
    %v1342 = vld [vmem:[#allocation5] sm:$0x3]
    %v1343 = vmul.f32 %v1342, %v1341
    %v1344 = vsub.f32 1.0, %v1341
    %v1345 = vmul.f32 %v1344, %v1338
    %v1346 = vadd.f32 %v1343, %v1345
    %v1347 = vmul.f32 %v1338, %v1341
    %v1348 = vsub.f32 %v1347, %v1343
    %v1349 = vmax.f32 %v1348, 0.0
    %v1350 = vadd.f32 %v1346, %v1349
    %vm1351 = vcmask 123904
    %1352 = vst.msk [vmem:[#allocation14] sm:$0x3] %vm1351, %v1350
    // Predicated region
    $region78: #{tpu_custom_call.1} parent=1 // pred_check
      _
    $region79: #{tpu_custom_call.1} parent=1 // pred_check_branch
      %1354 = sbr.rel (0) target = $region81
    $region80: #{tpu_custom_call.1} parent=1 // pred_region
      %s1356 = ssub.s32 32, 32
      %1357 = vsyncadd [#allocation4], %s1356
      %s1359 = sshll.u32 [#allocation14], 4
      %s1360 = int_to_ptr.vmem [resolvable:$true] %s1359
      %1362 = dma.vmem_to_hbm [thread:$0]  %s1360, 32, %s12, [#allocation4]
    $region81: #{tpu_custom_call.1} parent=1 // pred_fallthru
      _
    // Predicated region
    $region82: #{tpu_custom_call.1} parent=1 // pred_check
      _
    $region83: #{tpu_custom_call.1} parent=1 // pred_check_branch
      %1364 = sbr.rel (0) target = $region85
    $region84: #{tpu_custom_call.1} parent=1 // pred_region
      %1365 = dma.done [#allocation4], 32
    $region85: #{tpu_custom_call.1} parent=1 // pred_fallthru
      _
    %1366 = vsyncpa [#allocation3], 1
    %1367 = vsyncpa [#allocation6], 1
    %1368 = vsyncpa [#allocation9], 1
    %1369 = vsyncpa [#allocation12], 1
    %1370 = vsyncpa [#allocation4], 1

</llo_original>
